<compile_context>
chip_gen: v5e
topology: v5e:2x2
jax: 0.10.0
libtpu: 0.0.40
codegen_flags: <defaults>
</compile_context>

<pallas_src>
import jax
import jax.numpy as jnp
from jax.experimental import pallas as pl
from jax.experimental.pallas import tpu as pltpu


# ------------------------------ fused kernel -------------------------------- #

def _make_inception_kernel(H, W, chs):
    """Builds the fused InceptionBlock kernel for a static (H, W, channel) config."""
    c1, c2a, c2b, c3a, c3b, c4 = chs
    HW = H * W

    def kernel(x_ref, w1_ref, b1_ref, w2_ref, b2_ref, w3_ref, b3_ref, o_ref,
               pad3_ref, col3_ref, pad5_ref, col5_ref, padp_ref):
        # x_ref: (1, Cin, HW)  channel-major, lane-dense (HW on lanes).
        x2d = x_ref[0]

        # Column index of every lane (hoisted once); used for column-wrap masks.
        ww = jax.lax.broadcasted_iota(jnp.int32, (1, HW), 1) % W
        mask_cache = {}

        def col_mask(ox):
            # 1.0 where 0 <= w + ox < W, else 0.0 (column wrap-around lanes).
            if ox not in mask_cache:
                valid = (ww + ox >= 0) & (ww + ox < W)
                mask_cache[ox] = valid.astype(jnp.float32)
            return mask_cache[ox]

        def fill_pad(pad_ref, arr, p, c):
            # Flat row-padded slab: [p*(W+1) zeros | H*W image | p*(W+1) zeros].
            # Only the two halo strips are zeroed; the interior is overwritten.
            off0 = p * (W + 1)
            pad_ref[:, 0:off0] = jnp.zeros((c, off0), jnp.float32)
            pad_ref[:, off0 + HW:] = jnp.zeros((c, off0), jnp.float32)
            pad_ref[:, off0:off0 + HW] = arr

        def read_tap(pad_ref, p, oy, ox):
            # Tap (oy, ox) = contiguous lane window; row wrap reads the zero
            # strips, column wrap is masked (exactly the zero padding a SAME
            # conv / max-pool would see).
            off0 = p * (W + 1)
            s = off0 + oy * W + ox
            tap = pad_ref[:, s:s + HW]
            if ox != 0:
                tap = tap * col_mask(ox)
            return tap

        def conv_branch(arr, pad_ref, col_ref, w_ref, b_ref, k, c):
            # One stacked-K matmul: (cout, k*k*c) @ (k*k*c, HW).
            p = (k - 1) // 2
            fill_pad(pad_ref, arr, p, c)
            for dy in range(k):
                for dx in range(k):
                    t = dy * k + dx
                    col_ref[t * c:(t + 1) * c, :] = read_tap(pad_ref, p, dy - p, dx - p)
            acc = jnp.dot(w_ref[...], col_ref[...],
                          preferred_element_type=jnp.float32)
            return jnp.maximum(acc + b_ref[...], 0.0)

        # --- all four 1x1 convolutions fused: (c1+c2a+c3a+c4, Cin) @ (Cin, HW) ---
        y = jnp.dot(w1_ref[...], x2d, preferred_element_type=jnp.float32)
        y = jnp.maximum(y + b1_ref[...], 0.0)

        b1o = y[0:c1]
        b2a = y[c1:c1 + c2a]
        b3a = y[c1 + c2a:c1 + c2a + c3a]
        b4a = y[c1 + c2a + c3a:]

        # --- branch 1: 1x1 conv -> ReLU --------------------------------------- #
        o_ref[0, 0:c1, :] = b1o

        # --- branch 2: 3x3 conv (pad 1), single K=9*c2a matmul ----------------- #
        o_ref[0, c1:c1 + c2b, :] = conv_branch(
            b2a, pad3_ref, col3_ref, w2_ref, b2_ref, 3, c2a)

        # --- branch 3: 5x5 conv (pad 2), single K=25*c3a matmul ---------------- #
        o_ref[0, c1 + c2b:c1 + c2b + c3b, :] = conv_branch(
            b3a, pad5_ref, col5_ref, w3_ref, b3_ref, 5, c3a)

        # --- branch 4: 3x3 maxpool (pad 1); input >= 0 so zero fill is exact --- #
        fill_pad(padp_ref, b4a, 1, c4)
        m = None
        for dy in range(3):
            for dx in range(3):
                tap = read_tap(padp_ref, 1, dy - 1, dx - 1)
                m = tap if m is None else jnp.maximum(m, tap)
        o_ref[0, c1 + c2b + c3b:, :] = m

    return kernel


# ------------------------------ module forward ------------------------------ #

def inception_block_forward(x_nchw, p):
    """Pallas implementation of InceptionBlock.forward (halve_dim=False)."""
    x = x_nchw.astype(jnp.float32)
    N, Cin, H, W = x.shape
    HW = H * W
    x_flat = x.reshape(N, Cin, HW)                        # free reshape of NCHW

    c1 = p["w1"].shape[1]
    c2a, c2b = p["w2_1"].shape[1], p["w2_2"].shape[-1]
    c3a, c3b = p["w3_1"].shape[1], p["w3_2"].shape[-1]
    c4 = p["w4"].shape[1]
    ctot = c1 + c2b + c3b + c4

    # Fuse the four 1x1 convolutions into one (Cout_total, Cin) weight matrix.
    w1x1 = jnp.concatenate([p["w1"].T, p["w2_1"].T, p["w3_1"].T, p["w4"].T], axis=0)
    b1x1 = jnp.concatenate([p["b1"], p["b2_1"], p["b3_1"], p["b4"]]).reshape(-1, 1)
    # Conv weights pre-reshaped for the stacked-K im2col matmuls
    # (rows = (dy*k + dx)*Cin + cin, matching the in-kernel column order).
    w3x3 = p["w2_2"].reshape(9 * c2a, c2b).T              # (c2b, 9*c2a)
    b3x3 = p["b2_2"].reshape(-1, 1)
    w5x5 = p["w3_2"].reshape(25 * c3a, c3b).T             # (c3b, 25*c3a)
    b5x5 = p["b3_2"].reshape(-1, 1)

    kernel = _make_inception_kernel(H, W, (c1, c2a, c2b, c3a, c3b, c4))

    # VMEM budget from actual buffer sizes: double-buffered I/O blocks +
    # scratch slabs + headroom, clamped to [16 MiB, 64 MiB] (v7x-safe).
    io_bytes = 4 * (Cin * HW + ctot * HW + w1x1.size + b1x1.size
                    + w3x3.size + b3x3.size + w5x5.size + b5x5.size)
    scr_bytes = 4 * ((c2a + c4) * (HW + 2 * (W + 1)) + c3a * (HW + 4 * (W + 1))
                     + (9 * c2a + 25 * c3a) * HW)
    vmem_limit = int(min(max(2 * io_bytes + scr_bytes + (8 << 20), 16 << 20),
                         64 << 20))

    out = pl.pallas_call(
        kernel,
        out_shape=jax.ShapeDtypeStruct((N, ctot, HW), jnp.float32),
        grid=(N,),
        in_specs=[
            pl.BlockSpec((1, Cin, HW), lambda n: (n, 0, 0)),     # x, per image
            pl.BlockSpec(w1x1.shape, lambda n: (0, 0)),          # fused 1x1 W^T
            pl.BlockSpec(b1x1.shape, lambda n: (0, 0)),
            pl.BlockSpec(w3x3.shape, lambda n: (0, 0)),          # 3x3 stacked-K W
            pl.BlockSpec(b3x3.shape, lambda n: (0, 0)),
            pl.BlockSpec(w5x5.shape, lambda n: (0, 0)),          # 5x5 stacked-K W
            pl.BlockSpec(b5x5.shape, lambda n: (0, 0)),
        ],
        out_specs=pl.BlockSpec((1, ctot, HW), lambda n: (n, 0, 0)),
        scratch_shapes=[
            pltpu.VMEM((c2a, HW + 2 * (W + 1)), jnp.float32),    # 3x3 pad slab
            pltpu.VMEM((9 * c2a, HW), jnp.float32),              # 3x3 im2col
            pltpu.VMEM((c3a, HW + 4 * (W + 1)), jnp.float32),    # 5x5 pad slab
            pltpu.VMEM((25 * c3a, HW), jnp.float32),             # 5x5 im2col
            pltpu.VMEM((c4, HW + 2 * (W + 1)), jnp.float32),     # pool pad slab
        ],
        compiler_params=pltpu.CompilerParams(
            dimension_semantics=("parallel",),
            vmem_limit_bytes=vmem_limit,
        ),
    )(x_flat, w1x1, b1x1, w3x3, b3x3, w5x5, b5x5)

    return out.reshape(N, ctot, H, W)                     # already NCHW (free)


# ------------------------------- parameters --------------------------------- #

def init_inception_params(key, in_ch, conv1_ch, conv2_chs, conv3_chs, conv4_ch):
    ks = jax.random.split(key, 12)
    s = 0.1
    return {
        "w1":   jax.random.normal(ks[0], (in_ch, conv1_ch), jnp.float32) * s,
        "b1":   jax.random.normal(ks[1], (conv1_ch,), jnp.float32) * s,
        "w2_1": jax.random.normal(ks[2], (in_ch, conv2_chs[0]), jnp.float32) * s,
        "b2_1": jax.random.normal(ks[3], (conv2_chs[0],), jnp.float32) * s,
        "w2_2": jax.random.normal(ks[4], (3, 3, conv2_chs[0], conv2_chs[1]),
                                  jnp.float32) * s,
        "b2_2": jax.random.normal(ks[5], (conv2_chs[1],), jnp.float32) * s,
        "w3_1": jax.random.normal(ks[6], (in_ch, conv3_chs[0]), jnp.float32) * s,
        "b3_1": jax.random.normal(ks[7], (conv3_chs[0],), jnp.float32) * s,
        "w3_2": jax.random.normal(ks[8], (5, 5, conv3_chs[0], conv3_chs[1]),
                                  jnp.float32) * s,
        "b3_2": jax.random.normal(ks[9], (conv3_chs[1],), jnp.float32) * s,
        "w4":   jax.random.normal(ks[10], (in_ch, conv4_ch), jnp.float32) * s,
        "b4":   jax.random.normal(ks[11], (conv4_ch,), jnp.float32) * s,
    }


# --------------------------- pure-JAX reference ------------------------------ #

def _ref_forward(x_nchw, p):
    dn = ("NHWC", "HWIO", "NHWC")
    relu = lambda v: jnp.maximum(v, 0.0)

    def conv(x, w, b, pad):
        return jax.lax.conv_general_dilated(
            x, w, (1, 1), pad, dimension_numbers=dn) + b

    x = jnp.transpose(x_nchw, (0, 2, 3, 1))
    same0 = [(0, 0), (0, 0)]
    b1 = relu(conv(x, p["w1"].reshape(1, 1, *p["w1"].shape), p["b1"], same0))
    b2 = relu(conv(x, p["w2_1"].reshape(1, 1, *p["w2_1"].shape), p["b2_1"], same0))
    b2 = relu(conv(b2, p["w2_2"], p["b2_2"], [(1, 1), (1, 1)]))
    b3 = relu(conv(x, p["w3_1"].reshape(1, 1, *p["w3_1"].shape), p["b3_1"], same0))
    b3 = relu(conv(b3, p["w3_2"], p["b3_2"], [(2, 2), (2, 2)]))
    b4 = relu(conv(x, p["w4"].reshape(1, 1, *p["w4"].shape), p["b4"], same0))
    b4 = jax.lax.reduce_window(
        b4, -jnp.inf, jax.lax.max, (1, 3, 3, 1), (1, 1, 1, 1),
        padding=[(0, 0), (1, 1), (1, 1), (0, 0)])
    b4 = relu(b4)
    out = jnp.concatenate([b1, b2, b3, b4], axis=-1)
    return jnp.transpose(out, (0, 3, 1, 2))


# ----------------------------------- main ------------------------------------ #

if __name__ == "__main__":
    key = jax.random.PRNGKey(0)
    k_in, k_par = jax.random.split(key)

    N, C_IN, H, W = 2, 4, 16, 16
    conv1_ch, conv2_chs, conv3_chs, conv4_ch = 8, (4, 8), (4, 8), 8

    x = jax.random.normal(k_in, (N, C_IN, H, W), jnp.float32)
    params = init_inception_params(k_par, C_IN, conv1_ch, conv2_chs,
                                   conv3_chs, conv4_ch)

    out = inception_block_forward(x, params)
    out = jax.block_until_ready(out)

    expected_ch = conv1_ch + conv2_chs[1] + conv3_chs[1] + conv4_ch
    assert out.shape == (N, expected_ch, H, W), out.shape

    ref = jax.block_until_ready(_ref_forward(x, params))
    assert jnp.allclose(out, ref, atol=1e-4, rtol=1e-4), \
        float(jnp.max(jnp.abs(out - ref)))

    print("KERNEL_OK")
</pallas_src>

<mosaic_0001>
module attributes {stable_mosaic.version = 11 : i64} {
  func.func @kernel(%arg0: i32, %arg1: memref<1x4x256xf32, #tpu.memory_space<vmem>>, %arg2: memref<24x4xf32, #tpu.memory_space<vmem>>, %arg3: memref<24x1xf32, #tpu.memory_space<vmem>>, %arg4: memref<8x36xf32, #tpu.memory_space<vmem>>, %arg5: memref<8x1xf32, #tpu.memory_space<vmem>>, %arg6: memref<8x100xf32, #tpu.memory_space<vmem>>, %arg7: memref<8x1xf32, #tpu.memory_space<vmem>>, %arg8: memref<1x32x256xf32, #tpu.memory_space<vmem>>, %arg9: memref<4x290xf32, #tpu.memory_space<vmem>>, %arg10: memref<36x256xf32, #tpu.memory_space<vmem>>, %arg11: memref<4x324xf32, #tpu.memory_space<vmem>>, %arg12: memref<100x256xf32, #tpu.memory_space<vmem>>, %arg13: memref<8x290xf32, #tpu.memory_space<vmem>>) attributes {dimension_semantics = [#tpu.dimension_semantics<parallel>], iteration_bounds = array<i64: 2>, scalar_prefetch = 0 : i64, scratch_operands = 5 : i64, tpu.core_type = #tpu.core_type<tc>, window_params = [{transform_indices = @transform_0, window_bounds = array<i64: 1, 4, 256>}, {pipeline_mode = #tpu.pipeline_mode<synchronous>, transform_indices = @transform_1, window_bounds = array<i64: 24, 4>}, {pipeline_mode = #tpu.pipeline_mode<synchronous>, transform_indices = @transform_2, window_bounds = array<i64: 24, 1>}, {pipeline_mode = #tpu.pipeline_mode<synchronous>, transform_indices = @transform_3, window_bounds = array<i64: 8, 36>}, {pipeline_mode = #tpu.pipeline_mode<synchronous>, transform_indices = @transform_4, window_bounds = array<i64: 8, 1>}, {pipeline_mode = #tpu.pipeline_mode<synchronous>, transform_indices = @transform_5, window_bounds = array<i64: 8, 100>}, {pipeline_mode = #tpu.pipeline_mode<synchronous>, transform_indices = @transform_6, window_bounds = array<i64: 8, 1>}, {transform_indices = @transform_7, window_bounds = array<i64: 1, 32, 256>}]} {
    %c0 = arith.constant 0 : index
    %c0_0 = arith.constant 0 : index
    %c0_1 = arith.constant 0 : index
    %0 = vector.load %arg1[%c0, %c0_0, %c0_1] : memref<1x4x256xf32, #tpu.memory_space<vmem>>, vector<1x4x256xf32>
    %1 = vector.shape_cast %0 : vector<1x4x256xf32> to vector<4x256xf32>
    %2 = tpu.iota {dimensions = array<i32: 1>} : vector<1x256xi32>
    %c16_i32 = arith.constant 16 : i32
    %c0_i32 = arith.constant 0 : i32
    %3 = arith.cmpi eq, %c16_i32, %c0_i32 : i32
    %c1_i32 = arith.constant 1 : i32
    %4 = arith.select %3, %c1_i32, %c16_i32 : i32
    %5 = vector.broadcast %4 : i32 to vector<1x256xi32>
    %6 = arith.remsi %2, %5 : vector<1x256xi32>
    %c0_i32_2 = arith.constant 0 : i32
    %7 = vector.broadcast %c0_i32_2 : i32 to vector<1x256xi32>
    %8 = arith.cmpi ne, %6, %7 : vector<1x256xi32>
    %c0_i32_3 = arith.constant 0 : i32
    %9 = vector.broadcast %c0_i32_3 : i32 to vector<1x256xi32>
    %10 = arith.cmpi slt, %6, %9 : vector<1x256xi32>
    %c0_i32_4 = arith.constant 0 : i32
    %11 = arith.cmpi slt, %4, %c0_i32_4 : i32
    %12 = vector.broadcast %11 : i1 to vector<1x256xi1>
    %13 = vector.broadcast %12 : vector<1x256xi1> to vector<1x256xi1>
    %14 = arith.xori %10, %13 : vector<1x256xi1>
    %15 = arith.andi %14, %8 : vector<1x256xi1>
    %16 = vector.broadcast %4 : i32 to vector<1x256xi32>
    %17 = arith.addi %6, %16 : vector<1x256xi32>
    %18 = arith.select %15, %17, %6 : vector<1x256xi1>, vector<1x256xi32>
    %c0_5 = arith.constant 0 : index
    %c0_6 = arith.constant 0 : index
    %19 = vector.load %arg2[%c0_5, %c0_6] : memref<24x4xf32, #tpu.memory_space<vmem>>, vector<24x4xf32>
    %cst = arith.constant dense<0.000000e+00> : vector<24x256xf32>
    %20 = tpu.matmul %19, %1, %cst {dimension_numbers = #tpu.dot_dimension_numbers<[1], [0], [0], [1], [0, 0, 1, 1], [], []>} : vector<24x4xf32>, vector<4x256xf32>, vector<24x256xf32> -> vector<24x256xf32>
    %c0_7 = arith.constant 0 : index
    %c0_8 = arith.constant 0 : index
    %21 = vector.load %arg3[%c0_7, %c0_8] : memref<24x1xf32, #tpu.memory_space<vmem>>, vector<24x1xf32>
    %22 = vector.broadcast %21 : vector<24x1xf32> to vector<24x256xf32>
    %23 = arith.addf %20, %22 : vector<24x256xf32>
    %cst_9 = arith.constant 0.000000e+00 : f32
    %24 = vector.broadcast %cst_9 : f32 to vector<24x256xf32>
    %25 = arith.maximumf %23, %24 : vector<24x256xf32>
    %26 = vector.extract_strided_slice %25 {offsets = [0, 0], sizes = [8, 256], strides = [1, 1]} : vector<24x256xf32> to vector<8x256xf32>
    %27 = vector.extract_strided_slice %25 {offsets = [8, 0], sizes = [4, 256], strides = [1, 1]} : vector<24x256xf32> to vector<4x256xf32>
    %28 = vector.extract_strided_slice %25 {offsets = [12, 0], sizes = [4, 256], strides = [1, 1]} : vector<24x256xf32> to vector<4x256xf32>
    %29 = vector.extract_strided_slice %25 {offsets = [16, 0], sizes = [8, 256], strides = [1, 1]} : vector<24x256xf32> to vector<8x256xf32>
    %c0_10 = arith.constant 0 : index
    %c0_11 = arith.constant 0 : index
    %c0_12 = arith.constant 0 : index
    %30 = vector.load %arg8[%c0_10, %c0_11, %c0_12] : memref<1x32x256xf32, #tpu.memory_space<vmem>>, vector<1x8x256xf32>
    %31 = vector.shape_cast %30 : vector<1x8x256xf32> to vector<8x256xf32>
    %32 = vector.shape_cast %26 : vector<8x256xf32> to vector<1x8x256xf32>
    tpu.vector_store %arg8[%c0_10, %c0_11, %c0_12], %32 {strides = array<i32>} : memref<1x32x256xf32, #tpu.memory_space<vmem>>, vector<1x8x256xf32>,
    %cst_13 = arith.constant 0.000000e+00 : f32
    %33 = vector.broadcast %cst_13 : f32 to vector<4x17xf32>
    %c0_14 = arith.constant 0 : index
    %c0_15 = arith.constant 0 : index
    %34 = vector.load %arg9[%c0_14, %c0_15] : memref<4x290xf32, #tpu.memory_space<vmem>>, vector<4x17xf32>
    tpu.vector_store %arg9[%c0_14, %c0_15], %33 {strides = array<i32>} : memref<4x290xf32, #tpu.memory_space<vmem>>, vector<4x17xf32>,
    %cst_16 = arith.constant 0.000000e+00 : f32
    %35 = vector.broadcast %cst_16 : f32 to vector<4x17xf32>
    %c0_17 = arith.constant 0 : index
    %c273 = arith.constant 273 : index
    %36 = vector.load %arg9[%c0_17, %c273] : memref<4x290xf32, #tpu.memory_space<vmem>>, vector<4x17xf32>
    tpu.vector_store %arg9[%c0_17, %c273], %35 {strides = array<i32>} : memref<4x290xf32, #tpu.memory_space<vmem>>, vector<4x17xf32>,
    %c0_18 = arith.constant 0 : index
    %c17 = arith.constant 17 : index
    %37 = vector.load %arg9[%c0_18, %c17] : memref<4x290xf32, #tpu.memory_space<vmem>>, vector<4x256xf32>
    tpu.vector_store %arg9[%c0_18, %c17], %27 {strides = array<i32>} : memref<4x290xf32, #tpu.memory_space<vmem>>, vector<4x256xf32>,
    %c0_19 = arith.constant 0 : index
    %c0_20 = arith.constant 0 : index
    %38 = vector.load %arg9[%c0_19, %c0_20] : memref<4x290xf32, #tpu.memory_space<vmem>>, vector<4x256xf32>
    %c-1_i32 = arith.constant -1 : i32
    %39 = vector.broadcast %c-1_i32 : i32 to vector<1x256xi32>
    %40 = arith.addi %18, %39 : vector<1x256xi32>
    %c0_i32_21 = arith.constant 0 : i32
    %41 = vector.broadcast %c0_i32_21 : i32 to vector<1x256xi32>
    %42 = arith.cmpi sge, %40, %41 : vector<1x256xi32>
    %c-1_i32_22 = arith.constant -1 : i32
    %43 = vector.broadcast %c-1_i32_22 : i32 to vector<1x256xi32>
    %44 = arith.addi %18, %43 : vector<1x256xi32>
    %c16_i32_23 = arith.constant 16 : i32
    %45 = vector.broadcast %c16_i32_23 : i32 to vector<1x256xi32>
    %46 = arith.cmpi slt, %44, %45 : vector<1x256xi32>
    %47 = arith.andi %42, %46 : vector<1x256xi1>
    %48 = arith.extui %47 : vector<1x256xi1> to vector<1x256xi32>
    %49 = arith.sitofp %48 : vector<1x256xi32> to vector<1x256xf32>
    %50 = vector.broadcast %49 : vector<1x256xf32> to vector<4x256xf32>
    %51 = arith.mulf %38, %50 : vector<4x256xf32>
    %c0_24 = arith.constant 0 : index
    %c0_25 = arith.constant 0 : index
    %52 = vector.load %arg10[%c0_24, %c0_25] : memref<36x256xf32, #tpu.memory_space<vmem>>, vector<4x256xf32>
    tpu.vector_store %arg10[%c0_24, %c0_25], %51 {strides = array<i32>} : memref<36x256xf32, #tpu.memory_space<vmem>>, vector<4x256xf32>,
    %c0_26 = arith.constant 0 : index
    %c1 = arith.constant 1 : index
    %53 = vector.load %arg9[%c0_26, %c1] : memref<4x290xf32, #tpu.memory_space<vmem>>, vector<4x256xf32>
    %c4 = arith.constant 4 : index
    %c0_27 = arith.constant 0 : index
    %54 = vector.load %arg10[%c4, %c0_27] : memref<36x256xf32, #tpu.memory_space<vmem>>, vector<4x256xf32>
    tpu.vector_store %arg10[%c4, %c0_27], %53 {strides = array<i32>} : memref<36x256xf32, #tpu.memory_space<vmem>>, vector<4x256xf32>,
    %c0_28 = arith.constant 0 : index
    %c2 = arith.constant 2 : index
    %55 = vector.load %arg9[%c0_28, %c2] : memref<4x290xf32, #tpu.memory_space<vmem>>, vector<4x256xf32>
    %c1_i32_29 = arith.constant 1 : i32
    %56 = vector.broadcast %c1_i32_29 : i32 to vector<1x256xi32>
    %57 = arith.addi %18, %56 : vector<1x256xi32>
    %c0_i32_30 = arith.constant 0 : i32
    %58 = vector.broadcast %c0_i32_30 : i32 to vector<1x256xi32>
    %59 = arith.cmpi sge, %57, %58 : vector<1x256xi32>
    %c1_i32_31 = arith.constant 1 : i32
    %60 = vector.broadcast %c1_i32_31 : i32 to vector<1x256xi32>
    %61 = arith.addi %18, %60 : vector<1x256xi32>
    %c16_i32_32 = arith.constant 16 : i32
    %62 = vector.broadcast %c16_i32_32 : i32 to vector<1x256xi32>
    %63 = arith.cmpi slt, %61, %62 : vector<1x256xi32>
    %64 = arith.andi %59, %63 : vector<1x256xi1>
    %65 = arith.extui %64 : vector<1x256xi1> to vector<1x256xi32>
    %66 = arith.sitofp %65 : vector<1x256xi32> to vector<1x256xf32>
    %67 = vector.broadcast %66 : vector<1x256xf32> to vector<4x256xf32>
    %68 = arith.mulf %55, %67 : vector<4x256xf32>
    %c8 = arith.constant 8 : index
    %c0_33 = arith.constant 0 : index
    %69 = vector.load %arg10[%c8, %c0_33] : memref<36x256xf32, #tpu.memory_space<vmem>>, vector<4x256xf32>
    tpu.vector_store %arg10[%c8, %c0_33], %68 {strides = array<i32>} : memref<36x256xf32, #tpu.memory_space<vmem>>, vector<4x256xf32>,
    %c0_34 = arith.constant 0 : index
    %c16 = arith.constant 16 : index
    %70 = vector.load %arg9[%c0_34, %c16] : memref<4x290xf32, #tpu.memory_space<vmem>>, vector<4x256xf32>
    %71 = vector.broadcast %49 : vector<1x256xf32> to vector<4x256xf32>
    %72 = arith.mulf %70, %71 : vector<4x256xf32>
    %c12 = arith.constant 12 : index
    %c0_35 = arith.constant 0 : index
    %73 = vector.load %arg10[%c12, %c0_35] : memref<36x256xf32, #tpu.memory_space<vmem>>, vector<4x256xf32>
    tpu.vector_store %arg10[%c12, %c0_35], %72 {strides = array<i32>} : memref<36x256xf32, #tpu.memory_space<vmem>>, vector<4x256xf32>,
    %c0_36 = arith.constant 0 : index
    %c17_37 = arith.constant 17 : index
    %74 = vector.load %arg9[%c0_36, %c17_37] : memref<4x290xf32, #tpu.memory_space<vmem>>, vector<4x256xf32>
    %c16_38 = arith.constant 16 : index
    %c0_39 = arith.constant 0 : index
    %75 = vector.load %arg10[%c16_38, %c0_39] : memref<36x256xf32, #tpu.memory_space<vmem>>, vector<4x256xf32>
    tpu.vector_store %arg10[%c16_38, %c0_39], %74 {strides = array<i32>} : memref<36x256xf32, #tpu.memory_space<vmem>>, vector<4x256xf32>,
    %c0_40 = arith.constant 0 : index
    %c18 = arith.constant 18 : index
    %76 = vector.load %arg9[%c0_40, %c18] : memref<4x290xf32, #tpu.memory_space<vmem>>, vector<4x256xf32>
    %77 = vector.broadcast %66 : vector<1x256xf32> to vector<4x256xf32>
    %78 = arith.mulf %76, %77 : vector<4x256xf32>
    %c20 = arith.constant 20 : index
    %c0_41 = arith.constant 0 : index
    %79 = vector.load %arg10[%c20, %c0_41] : memref<36x256xf32, #tpu.memory_space<vmem>>, vector<4x256xf32>
    tpu.vector_store %arg10[%c20, %c0_41], %78 {strides = array<i32>} : memref<36x256xf32, #tpu.memory_space<vmem>>, vector<4x256xf32>,
    %c0_42 = arith.constant 0 : index
    %c32 = arith.constant 32 : index
    %80 = vector.load %arg9[%c0_42, %c32] : memref<4x290xf32, #tpu.memory_space<vmem>>, vector<4x256xf32>
    %81 = vector.broadcast %49 : vector<1x256xf32> to vector<4x256xf32>
    %82 = arith.mulf %80, %81 : vector<4x256xf32>
    %c24 = arith.constant 24 : index
    %c0_43 = arith.constant 0 : index
    %83 = vector.load %arg10[%c24, %c0_43] : memref<36x256xf32, #tpu.memory_space<vmem>>, vector<4x256xf32>
    tpu.vector_store %arg10[%c24, %c0_43], %82 {strides = array<i32>} : memref<36x256xf32, #tpu.memory_space<vmem>>, vector<4x256xf32>,
    %c0_44 = arith.constant 0 : index
    %c33 = arith.constant 33 : index
    %84 = vector.load %arg9[%c0_44, %c33] : memref<4x290xf32, #tpu.memory_space<vmem>>, vector<4x256xf32>
    %c28 = arith.constant 28 : index
    %c0_45 = arith.constant 0 : index
    %85 = vector.load %arg10[%c28, %c0_45] : memref<36x256xf32, #tpu.memory_space<vmem>>, vector<4x256xf32>
    tpu.vector_store %arg10[%c28, %c0_45], %84 {strides = array<i32>} : memref<36x256xf32, #tpu.memory_space<vmem>>, vector<4x256xf32>,
    %c0_46 = arith.constant 0 : index
    %c34 = arith.constant 34 : index
    %86 = vector.load %arg9[%c0_46, %c34] : memref<4x290xf32, #tpu.memory_space<vmem>>, vector<4x256xf32>
    %87 = vector.broadcast %66 : vector<1x256xf32> to vector<4x256xf32>
    %88 = arith.mulf %86, %87 : vector<4x256xf32>
    %c32_47 = arith.constant 32 : index
    %c0_48 = arith.constant 0 : index
    %89 = vector.load %arg10[%c32_47, %c0_48] : memref<36x256xf32, #tpu.memory_space<vmem>>, vector<4x256xf32>
    tpu.vector_store %arg10[%c32_47, %c0_48], %88 {strides = array<i32>} : memref<36x256xf32, #tpu.memory_space<vmem>>, vector<4x256xf32>,
    %c0_49 = arith.constant 0 : index
    %c0_50 = arith.constant 0 : index
    %90 = vector.load %arg4[%c0_49, %c0_50] : memref<8x36xf32, #tpu.memory_space<vmem>>, vector<8x36xf32>
    %c0_51 = arith.constant 0 : index
    %c0_52 = arith.constant 0 : index
    %91 = vector.load %arg10[%c0_51, %c0_52] : memref<36x256xf32, #tpu.memory_space<vmem>>, vector<36x256xf32>
    %cst_53 = arith.constant dense<0.000000e+00> : vector<8x256xf32>
    %92 = tpu.matmul %90, %91, %cst_53 {dimension_numbers = #tpu.dot_dimension_numbers<[1], [0], [0], [1], [0, 0, 1, 1], [], []>} : vector<8x36xf32>, vector<36x256xf32>, vector<8x256xf32> -> vector<8x256xf32>
    %c0_54 = arith.constant 0 : index
    %c0_55 = arith.constant 0 : index
    %93 = vector.load %arg5[%c0_54, %c0_55] : memref<8x1xf32, #tpu.memory_space<vmem>>, vector<8x1xf32>
    %94 = vector.broadcast %93 : vector<8x1xf32> to vector<8x256xf32>
    %95 = arith.addf %92, %94 : vector<8x256xf32>
    %cst_56 = arith.constant 0.000000e+00 : f32
    %96 = vector.broadcast %cst_56 : f32 to vector<8x256xf32>
    %97 = arith.maximumf %95, %96 : vector<8x256xf32>
    %c0_57 = arith.constant 0 : index
    %c8_58 = arith.constant 8 : index
    %c0_59 = arith.constant 0 : index
    %98 = vector.load %arg8[%c0_57, %c8_58, %c0_59] : memref<1x32x256xf32, #tpu.memory_space<vmem>>, vector<1x8x256xf32>
    %99 = vector.shape_cast %98 : vector<1x8x256xf32> to vector<8x256xf32>
    %100 = vector.shape_cast %97 : vector<8x256xf32> to vector<1x8x256xf32>
    tpu.vector_store %arg8[%c0_57, %c8_58, %c0_59], %100 {strides = array<i32>} : memref<1x32x256xf32, #tpu.memory_space<vmem>>, vector<1x8x256xf32>,
    %cst_60 = arith.constant 0.000000e+00 : f32
    %101 = vector.broadcast %cst_60 : f32 to vector<4x34xf32>
    %c0_61 = arith.constant 0 : index
    %c0_62 = arith.constant 0 : index
    %102 = vector.load %arg11[%c0_61, %c0_62] : memref<4x324xf32, #tpu.memory_space<vmem>>, vector<4x34xf32>
    tpu.vector_store %arg11[%c0_61, %c0_62], %101 {strides = array<i32>} : memref<4x324xf32, #tpu.memory_space<vmem>>, vector<4x34xf32>,
    %cst_63 = arith.constant 0.000000e+00 : f32
    %103 = vector.broadcast %cst_63 : f32 to vector<4x34xf32>
    %c0_64 = arith.constant 0 : index
    %c290 = arith.constant 290 : index
    %104 = vector.load %arg11[%c0_64, %c290] : memref<4x324xf32, #tpu.memory_space<vmem>>, vector<4x34xf32>
    tpu.vector_store %arg11[%c0_64, %c290], %103 {strides = array<i32>} : memref<4x324xf32, #tpu.memory_space<vmem>>, vector<4x34xf32>,
    %c0_65 = arith.constant 0 : index
    %c34_66 = arith.constant 34 : index
    %105 = vector.load %arg11[%c0_65, %c34_66] : memref<4x324xf32, #tpu.memory_space<vmem>>, vector<4x256xf32>
    tpu.vector_store %arg11[%c0_65, %c34_66], %28 {strides = array<i32>} : memref<4x324xf32, #tpu.memory_space<vmem>>, vector<4x256xf32>,
    %c0_67 = arith.constant 0 : index
    %c0_68 = arith.constant 0 : index
    %106 = vector.load %arg11[%c0_67, %c0_68] : memref<4x324xf32, #tpu.memory_space<vmem>>, vector<4x256xf32>
    %c-2_i32 = arith.constant -2 : i32
    %107 = vector.broadcast %c-2_i32 : i32 to vector<1x256xi32>
    %108 = arith.addi %18, %107 : vector<1x256xi32>
    %c0_i32_69 = arith.constant 0 : i32
    %109 = vector.broadcast %c0_i32_69 : i32 to vector<1x256xi32>
    %110 = arith.cmpi sge, %108, %109 : vector<1x256xi32>
    %c-2_i32_70 = arith.constant -2 : i32
    %111 = vector.broadcast %c-2_i32_70 : i32 to vector<1x256xi32>
    %112 = arith.addi %18, %111 : vector<1x256xi32>
    %c16_i32_71 = arith.constant 16 : i32
    %113 = vector.broadcast %c16_i32_71 : i32 to vector<1x256xi32>
    %114 = arith.cmpi slt, %112, %113 : vector<1x256xi32>
    %115 = arith.andi %110, %114 : vector<1x256xi1>
    %116 = arith.extui %115 : vector<1x256xi1> to vector<1x256xi32>
    %117 = arith.sitofp %116 : vector<1x256xi32> to vector<1x256xf32>
    %118 = vector.broadcast %117 : vector<1x256xf32> to vector<4x256xf32>
    %119 = arith.mulf %106, %118 : vector<4x256xf32>
    %c0_72 = arith.constant 0 : index
    %c0_73 = arith.constant 0 : index
    %120 = vector.load %arg12[%c0_72, %c0_73] : memref<100x256xf32, #tpu.memory_space<vmem>>, vector<4x256xf32>
    tpu.vector_store %arg12[%c0_72, %c0_73], %119 {strides = array<i32>} : memref<100x256xf32, #tpu.memory_space<vmem>>, vector<4x256xf32>,
    %c0_74 = arith.constant 0 : index
    %c1_75 = arith.constant 1 : index
    %121 = vector.load %arg11[%c0_74, %c1_75] : memref<4x324xf32, #tpu.memory_space<vmem>>, vector<4x256xf32>
    %122 = vector.broadcast %49 : vector<1x256xf32> to vector<4x256xf32>
    %123 = arith.mulf %121, %122 : vector<4x256xf32>
    %c4_76 = arith.constant 4 : index
    %c0_77 = arith.constant 0 : index
    %124 = vector.load %arg12[%c4_76, %c0_77] : memref<100x256xf32, #tpu.memory_space<vmem>>, vector<4x256xf32>
    tpu.vector_store %arg12[%c4_76, %c0_77], %123 {strides = array<i32>} : memref<100x256xf32, #tpu.memory_space<vmem>>, vector<4x256xf32>,
    %c0_78 = arith.constant 0 : index
    %c2_79 = arith.constant 2 : index
    %125 = vector.load %arg11[%c0_78, %c2_79] : memref<4x324xf32, #tpu.memory_space<vmem>>, vector<4x256xf32>
    %c8_80 = arith.constant 8 : index
    %c0_81 = arith.constant 0 : index
    %126 = vector.load %arg12[%c8_80, %c0_81] : memref<100x256xf32, #tpu.memory_space<vmem>>, vector<4x256xf32>
    tpu.vector_store %arg12[%c8_80, %c0_81], %125 {strides = array<i32>} : memref<100x256xf32, #tpu.memory_space<vmem>>, vector<4x256xf32>,
    %c0_82 = arith.constant 0 : index
    %c3 = arith.constant 3 : index
    %127 = vector.load %arg11[%c0_82, %c3] : memref<4x324xf32, #tpu.memory_space<vmem>>, vector<4x256xf32>
    %128 = vector.broadcast %66 : vector<1x256xf32> to vector<4x256xf32>
    %129 = arith.mulf %127, %128 : vector<4x256xf32>
    %c12_83 = arith.constant 12 : index
    %c0_84 = arith.constant 0 : index
    %130 = vector.load %arg12[%c12_83, %c0_84] : memref<100x256xf32, #tpu.memory_space<vmem>>, vector<4x256xf32>
    tpu.vector_store %arg12[%c12_83, %c0_84], %129 {strides = array<i32>} : memref<100x256xf32, #tpu.memory_space<vmem>>, vector<4x256xf32>,
    %c0_85 = arith.constant 0 : index
    %c4_86 = arith.constant 4 : index
    %131 = vector.load %arg11[%c0_85, %c4_86] : memref<4x324xf32, #tpu.memory_space<vmem>>, vector<4x256xf32>
    %c2_i32 = arith.constant 2 : i32
    %132 = vector.broadcast %c2_i32 : i32 to vector<1x256xi32>
    %133 = arith.addi %18, %132 : vector<1x256xi32>
    %c0_i32_87 = arith.constant 0 : i32
    %134 = vector.broadcast %c0_i32_87 : i32 to vector<1x256xi32>
    %135 = arith.cmpi sge, %133, %134 : vector<1x256xi32>
    %c2_i32_88 = arith.constant 2 : i32
    %136 = vector.broadcast %c2_i32_88 : i32 to vector<1x256xi32>
    %137 = arith.addi %18, %136 : vector<1x256xi32>
    %c16_i32_89 = arith.constant 16 : i32
    %138 = vector.broadcast %c16_i32_89 : i32 to vector<1x256xi32>
    %139 = arith.cmpi slt, %137, %138 : vector<1x256xi32>
    %140 = arith.andi %135, %139 : vector<1x256xi1>
    %141 = arith.extui %140 : vector<1x256xi1> to vector<1x256xi32>
    %142 = arith.sitofp %141 : vector<1x256xi32> to vector<1x256xf32>
    %143 = vector.broadcast %142 : vector<1x256xf32> to vector<4x256xf32>
    %144 = arith.mulf %131, %143 : vector<4x256xf32>
    %c16_90 = arith.constant 16 : index
    %c0_91 = arith.constant 0 : index
    %145 = vector.load %arg12[%c16_90, %c0_91] : memref<100x256xf32, #tpu.memory_space<vmem>>, vector<4x256xf32>
    tpu.vector_store %arg12[%c16_90, %c0_91], %144 {strides = array<i32>} : memref<100x256xf32, #tpu.memory_space<vmem>>, vector<4x256xf32>,
    %c0_92 = arith.constant 0 : index
    %c16_93 = arith.constant 16 : index
    %146 = vector.load %arg11[%c0_92, %c16_93] : memref<4x324xf32, #tpu.memory_space<vmem>>, vector<4x256xf32>
    %147 = vector.broadcast %117 : vector<1x256xf32> to vector<4x256xf32>
    %148 = arith.mulf %146, %147 : vector<4x256xf32>
    %c20_94 = arith.constant 20 : index
    %c0_95 = arith.constant 0 : index
    %149 = vector.load %arg12[%c20_94, %c0_95] : memref<100x256xf32, #tpu.memory_space<vmem>>, vector<4x256xf32>
    tpu.vector_store %arg12[%c20_94, %c0_95], %148 {strides = array<i32>} : memref<100x256xf32, #tpu.memory_space<vmem>>, vector<4x256xf32>,
    %c0_96 = arith.constant 0 : index
    %c17_97 = arith.constant 17 : index
    %150 = vector.load %arg11[%c0_96, %c17_97] : memref<4x324xf32, #tpu.memory_space<vmem>>, vector<4x256xf32>
    %151 = vector.broadcast %49 : vector<1x256xf32> to vector<4x256xf32>
    %152 = arith.mulf %150, %151 : vector<4x256xf32>
    %c24_98 = arith.constant 24 : index
    %c0_99 = arith.constant 0 : index
    %153 = vector.load %arg12[%c24_98, %c0_99] : memref<100x256xf32, #tpu.memory_space<vmem>>, vector<4x256xf32>
    tpu.vector_store %arg12[%c24_98, %c0_99], %152 {strides = array<i32>} : memref<100x256xf32, #tpu.memory_space<vmem>>, vector<4x256xf32>,
    %c0_100 = arith.constant 0 : index
    %c18_101 = arith.constant 18 : index
    %154 = vector.load %arg11[%c0_100, %c18_101] : memref<4x324xf32, #tpu.memory_space<vmem>>, vector<4x256xf32>
    %c28_102 = arith.constant 28 : index
    %c0_103 = arith.constant 0 : index
    %155 = vector.load %arg12[%c28_102, %c0_103] : memref<100x256xf32, #tpu.memory_space<vmem>>, vector<4x256xf32>
    tpu.vector_store %arg12[%c28_102, %c0_103], %154 {strides = array<i32>} : memref<100x256xf32, #tpu.memory_space<vmem>>, vector<4x256xf32>,
    %c0_104 = arith.constant 0 : index
    %c19 = arith.constant 19 : index
    %156 = vector.load %arg11[%c0_104, %c19] : memref<4x324xf32, #tpu.memory_space<vmem>>, vector<4x256xf32>
    %157 = vector.broadcast %66 : vector<1x256xf32> to vector<4x256xf32>
    %158 = arith.mulf %156, %157 : vector<4x256xf32>
    %c32_105 = arith.constant 32 : index
    %c0_106 = arith.constant 0 : index
    %159 = vector.load %arg12[%c32_105, %c0_106] : memref<100x256xf32, #tpu.memory_space<vmem>>, vector<4x256xf32>
    tpu.vector_store %arg12[%c32_105, %c0_106], %158 {strides = array<i32>} : memref<100x256xf32, #tpu.memory_space<vmem>>, vector<4x256xf32>,
    %c0_107 = arith.constant 0 : index
    %c20_108 = arith.constant 20 : index
    %160 = vector.load %arg11[%c0_107, %c20_108] : memref<4x324xf32, #tpu.memory_space<vmem>>, vector<4x256xf32>
    %161 = vector.broadcast %142 : vector<1x256xf32> to vector<4x256xf32>
    %162 = arith.mulf %160, %161 : vector<4x256xf32>
    %c36 = arith.constant 36 : index
    %c0_109 = arith.constant 0 : index
    %163 = vector.load %arg12[%c36, %c0_109] : memref<100x256xf32, #tpu.memory_space<vmem>>, vector<4x256xf32>
    tpu.vector_store %arg12[%c36, %c0_109], %162 {strides = array<i32>} : memref<100x256xf32, #tpu.memory_space<vmem>>, vector<4x256xf32>,
    %c0_110 = arith.constant 0 : index
    %c32_111 = arith.constant 32 : index
    %164 = vector.load %arg11[%c0_110, %c32_111] : memref<4x324xf32, #tpu.memory_space<vmem>>, vector<4x256xf32>
    %165 = vector.broadcast %117 : vector<1x256xf32> to vector<4x256xf32>
    %166 = arith.mulf %164, %165 : vector<4x256xf32>
    %c40 = arith.constant 40 : index
    %c0_112 = arith.constant 0 : index
    %167 = vector.load %arg12[%c40, %c0_112] : memref<100x256xf32, #tpu.memory_space<vmem>>, vector<4x256xf32>
    tpu.vector_store %arg12[%c40, %c0_112], %166 {strides = array<i32>} : memref<100x256xf32, #tpu.memory_space<vmem>>, vector<4x256xf32>,
    %c0_113 = arith.constant 0 : index
    %c33_114 = arith.constant 33 : index
    %168 = vector.load %arg11[%c0_113, %c33_114] : memref<4x324xf32, #tpu.memory_space<vmem>>, vector<4x256xf32>
    %169 = vector.broadcast %49 : vector<1x256xf32> to vector<4x256xf32>
    %170 = arith.mulf %168, %169 : vector<4x256xf32>
    %c44 = arith.constant 44 : index
    %c0_115 = arith.constant 0 : index
    %171 = vector.load %arg12[%c44, %c0_115] : memref<100x256xf32, #tpu.memory_space<vmem>>, vector<4x256xf32>
    tpu.vector_store %arg12[%c44, %c0_115], %170 {strides = array<i32>} : memref<100x256xf32, #tpu.memory_space<vmem>>, vector<4x256xf32>,
    %c0_116 = arith.constant 0 : index
    %c34_117 = arith.constant 34 : index
    %172 = vector.load %arg11[%c0_116, %c34_117] : memref<4x324xf32, #tpu.memory_space<vmem>>, vector<4x256xf32>
    %c48 = arith.constant 48 : index
    %c0_118 = arith.constant 0 : index
    %173 = vector.load %arg12[%c48, %c0_118] : memref<100x256xf32, #tpu.memory_space<vmem>>, vector<4x256xf32>
    tpu.vector_store %arg12[%c48, %c0_118], %172 {strides = array<i32>} : memref<100x256xf32, #tpu.memory_space<vmem>>, vector<4x256xf32>,
    %c0_119 = arith.constant 0 : index
    %c35 = arith.constant 35 : index
    %174 = vector.load %arg11[%c0_119, %c35] : memref<4x324xf32, #tpu.memory_space<vmem>>, vector<4x256xf32>
    %175 = vector.broadcast %66 : vector<1x256xf32> to vector<4x256xf32>
    %176 = arith.mulf %174, %175 : vector<4x256xf32>
    %c52 = arith.constant 52 : index
    %c0_120 = arith.constant 0 : index
    %177 = vector.load %arg12[%c52, %c0_120] : memref<100x256xf32, #tpu.memory_space<vmem>>, vector<4x256xf32>
    tpu.vector_store %arg12[%c52, %c0_120], %176 {strides = array<i32>} : memref<100x256xf32, #tpu.memory_space<vmem>>, vector<4x256xf32>,
    %c0_121 = arith.constant 0 : index
    %c36_122 = arith.constant 36 : index
    %178 = vector.load %arg11[%c0_121, %c36_122] : memref<4x324xf32, #tpu.memory_space<vmem>>, vector<4x256xf32>
    %179 = vector.broadcast %142 : vector<1x256xf32> to vector<4x256xf32>
    %180 = arith.mulf %178, %179 : vector<4x256xf32>
    %c56 = arith.constant 56 : index
    %c0_123 = arith.constant 0 : index
    %181 = vector.load %arg12[%c56, %c0_123] : memref<100x256xf32, #tpu.memory_space<vmem>>, vector<4x256xf32>
    tpu.vector_store %arg12[%c56, %c0_123], %180 {strides = array<i32>} : memref<100x256xf32, #tpu.memory_space<vmem>>, vector<4x256xf32>,
    %c0_124 = arith.constant 0 : index
    %c48_125 = arith.constant 48 : index
    %182 = vector.load %arg11[%c0_124, %c48_125] : memref<4x324xf32, #tpu.memory_space<vmem>>, vector<4x256xf32>
    %183 = vector.broadcast %117 : vector<1x256xf32> to vector<4x256xf32>
    %184 = arith.mulf %182, %183 : vector<4x256xf32>
    %c60 = arith.constant 60 : index
    %c0_126 = arith.constant 0 : index
    %185 = vector.load %arg12[%c60, %c0_126] : memref<100x256xf32, #tpu.memory_space<vmem>>, vector<4x256xf32>
    tpu.vector_store %arg12[%c60, %c0_126], %184 {strides = array<i32>} : memref<100x256xf32, #tpu.memory_space<vmem>>, vector<4x256xf32>,
    %c0_127 = arith.constant 0 : index
    %c49 = arith.constant 49 : index
    %186 = vector.load %arg11[%c0_127, %c49] : memref<4x324xf32, #tpu.memory_space<vmem>>, vector<4x256xf32>
    %187 = vector.broadcast %49 : vector<1x256xf32> to vector<4x256xf32>
    %188 = arith.mulf %186, %187 : vector<4x256xf32>
    %c64 = arith.constant 64 : index
    %c0_128 = arith.constant 0 : index
    %189 = vector.load %arg12[%c64, %c0_128] : memref<100x256xf32, #tpu.memory_space<vmem>>, vector<4x256xf32>
    tpu.vector_store %arg12[%c64, %c0_128], %188 {strides = array<i32>} : memref<100x256xf32, #tpu.memory_space<vmem>>, vector<4x256xf32>,
    %c0_129 = arith.constant 0 : index
    %c50 = arith.constant 50 : index
    %190 = vector.load %arg11[%c0_129, %c50] : memref<4x324xf32, #tpu.memory_space<vmem>>, vector<4x256xf32>
    %c68 = arith.constant 68 : index
    %c0_130 = arith.constant 0 : index
    %191 = vector.load %arg12[%c68, %c0_130] : memref<100x256xf32, #tpu.memory_space<vmem>>, vector<4x256xf32>
    tpu.vector_store %arg12[%c68, %c0_130], %190 {strides = array<i32>} : memref<100x256xf32, #tpu.memory_space<vmem>>, vector<4x256xf32>,
    %c0_131 = arith.constant 0 : index
    %c51 = arith.constant 51 : index
    %192 = vector.load %arg11[%c0_131, %c51] : memref<4x324xf32, #tpu.memory_space<vmem>>, vector<4x256xf32>
    %193 = vector.broadcast %66 : vector<1x256xf32> to vector<4x256xf32>
    %194 = arith.mulf %192, %193 : vector<4x256xf32>
    %c72 = arith.constant 72 : index
    %c0_132 = arith.constant 0 : index
    %195 = vector.load %arg12[%c72, %c0_132] : memref<100x256xf32, #tpu.memory_space<vmem>>, vector<4x256xf32>
    tpu.vector_store %arg12[%c72, %c0_132], %194 {strides = array<i32>} : memref<100x256xf32, #tpu.memory_space<vmem>>, vector<4x256xf32>,
    %c0_133 = arith.constant 0 : index
    %c52_134 = arith.constant 52 : index
    %196 = vector.load %arg11[%c0_133, %c52_134] : memref<4x324xf32, #tpu.memory_space<vmem>>, vector<4x256xf32>
    %197 = vector.broadcast %142 : vector<1x256xf32> to vector<4x256xf32>
    %198 = arith.mulf %196, %197 : vector<4x256xf32>
    %c76 = arith.constant 76 : index
    %c0_135 = arith.constant 0 : index
    %199 = vector.load %arg12[%c76, %c0_135] : memref<100x256xf32, #tpu.memory_space<vmem>>, vector<4x256xf32>
    tpu.vector_store %arg12[%c76, %c0_135], %198 {strides = array<i32>} : memref<100x256xf32, #tpu.memory_space<vmem>>, vector<4x256xf32>,
    %c0_136 = arith.constant 0 : index
    %c64_137 = arith.constant 64 : index
    %200 = vector.load %arg11[%c0_136, %c64_137] : memref<4x324xf32, #tpu.memory_space<vmem>>, vector<4x256xf32>
    %201 = vector.broadcast %117 : vector<1x256xf32> to vector<4x256xf32>
    %202 = arith.mulf %200, %201 : vector<4x256xf32>
    %c80 = arith.constant 80 : index
    %c0_138 = arith.constant 0 : index
    %203 = vector.load %arg12[%c80, %c0_138] : memref<100x256xf32, #tpu.memory_space<vmem>>, vector<4x256xf32>
    tpu.vector_store %arg12[%c80, %c0_138], %202 {strides = array<i32>} : memref<100x256xf32, #tpu.memory_space<vmem>>, vector<4x256xf32>,
    %c0_139 = arith.constant 0 : index
    %c65 = arith.constant 65 : index
    %204 = vector.load %arg11[%c0_139, %c65] : memref<4x324xf32, #tpu.memory_space<vmem>>, vector<4x256xf32>
    %205 = vector.broadcast %49 : vector<1x256xf32> to vector<4x256xf32>
    %206 = arith.mulf %204, %205 : vector<4x256xf32>
    %c84 = arith.constant 84 : index
    %c0_140 = arith.constant 0 : index
    %207 = vector.load %arg12[%c84, %c0_140] : memref<100x256xf32, #tpu.memory_space<vmem>>, vector<4x256xf32>
    tpu.vector_store %arg12[%c84, %c0_140], %206 {strides = array<i32>} : memref<100x256xf32, #tpu.memory_space<vmem>>, vector<4x256xf32>,
    %c0_141 = arith.constant 0 : index
    %c66 = arith.constant 66 : index
    %208 = vector.load %arg11[%c0_141, %c66] : memref<4x324xf32, #tpu.memory_space<vmem>>, vector<4x256xf32>
    %c88 = arith.constant 88 : index
    %c0_142 = arith.constant 0 : index
    %209 = vector.load %arg12[%c88, %c0_142] : memref<100x256xf32, #tpu.memory_space<vmem>>, vector<4x256xf32>
    tpu.vector_store %arg12[%c88, %c0_142], %208 {strides = array<i32>} : memref<100x256xf32, #tpu.memory_space<vmem>>, vector<4x256xf32>,
    %c0_143 = arith.constant 0 : index
    %c67 = arith.constant 67 : index
    %210 = vector.load %arg11[%c0_143, %c67] : memref<4x324xf32, #tpu.memory_space<vmem>>, vector<4x256xf32>
    %211 = vector.broadcast %66 : vector<1x256xf32> to vector<4x256xf32>
    %212 = arith.mulf %210, %211 : vector<4x256xf32>
    %c92 = arith.constant 92 : index
    %c0_144 = arith.constant 0 : index
    %213 = vector.load %arg12[%c92, %c0_144] : memref<100x256xf32, #tpu.memory_space<vmem>>, vector<4x256xf32>
    tpu.vector_store %arg12[%c92, %c0_144], %212 {strides = array<i32>} : memref<100x256xf32, #tpu.memory_space<vmem>>, vector<4x256xf32>,
    %c0_145 = arith.constant 0 : index
    %c68_146 = arith.constant 68 : index
    %214 = vector.load %arg11[%c0_145, %c68_146] : memref<4x324xf32, #tpu.memory_space<vmem>>, vector<4x256xf32>
    %215 = vector.broadcast %142 : vector<1x256xf32> to vector<4x256xf32>
    %216 = arith.mulf %214, %215 : vector<4x256xf32>
    %c96 = arith.constant 96 : index
    %c0_147 = arith.constant 0 : index
    %217 = vector.load %arg12[%c96, %c0_147] : memref<100x256xf32, #tpu.memory_space<vmem>>, vector<4x256xf32>
    tpu.vector_store %arg12[%c96, %c0_147], %216 {strides = array<i32>} : memref<100x256xf32, #tpu.memory_space<vmem>>, vector<4x256xf32>,
    %c0_148 = arith.constant 0 : index
    %c0_149 = arith.constant 0 : index
    %218 = vector.load %arg6[%c0_148, %c0_149] : memref<8x100xf32, #tpu.memory_space<vmem>>, vector<8x100xf32>
    %c0_150 = arith.constant 0 : index
    %c0_151 = arith.constant 0 : index
    %219 = vector.load %arg12[%c0_150, %c0_151] : memref<100x256xf32, #tpu.memory_space<vmem>>, vector<100x256xf32>
    %cst_152 = arith.constant dense<0.000000e+00> : vector<8x256xf32>
    %220 = tpu.matmul %218, %219, %cst_152 {dimension_numbers = #tpu.dot_dimension_numbers<[1], [0], [0], [1], [0, 0, 1, 1], [], []>} : vector<8x100xf32>, vector<100x256xf32>, vector<8x256xf32> -> vector<8x256xf32>
    %c0_153 = arith.constant 0 : index
    %c0_154 = arith.constant 0 : index
    %221 = vector.load %arg7[%c0_153, %c0_154] : memref<8x1xf32, #tpu.memory_space<vmem>>, vector<8x1xf32>
    %222 = vector.broadcast %221 : vector<8x1xf32> to vector<8x256xf32>
    %223 = arith.addf %220, %222 : vector<8x256xf32>
    %cst_155 = arith.constant 0.000000e+00 : f32
    %224 = vector.broadcast %cst_155 : f32 to vector<8x256xf32>
    %225 = arith.maximumf %223, %224 : vector<8x256xf32>
    %c0_156 = arith.constant 0 : index
    %c16_157 = arith.constant 16 : index
    %c0_158 = arith.constant 0 : index
    %226 = vector.load %arg8[%c0_156, %c16_157, %c0_158] : memref<1x32x256xf32, #tpu.memory_space<vmem>>, vector<1x8x256xf32>
    %227 = vector.shape_cast %226 : vector<1x8x256xf32> to vector<8x256xf32>
    %228 = vector.shape_cast %225 : vector<8x256xf32> to vector<1x8x256xf32>
    tpu.vector_store %arg8[%c0_156, %c16_157, %c0_158], %228 {strides = array<i32>} : memref<1x32x256xf32, #tpu.memory_space<vmem>>, vector<1x8x256xf32>,
    %cst_159 = arith.constant 0.000000e+00 : f32
    %229 = vector.broadcast %cst_159 : f32 to vector<8x17xf32>
    %c0_160 = arith.constant 0 : index
    %c0_161 = arith.constant 0 : index
    %230 = vector.load %arg13[%c0_160, %c0_161] : memref<8x290xf32, #tpu.memory_space<vmem>>, vector<8x17xf32>
    tpu.vector_store %arg13[%c0_160, %c0_161], %229 {strides = array<i32>} : memref<8x290xf32, #tpu.memory_space<vmem>>, vector<8x17xf32>,
    %cst_162 = arith.constant 0.000000e+00 : f32
    %231 = vector.broadcast %cst_162 : f32 to vector<8x17xf32>
    %c0_163 = arith.constant 0 : index
    %c273_164 = arith.constant 273 : index
    %232 = vector.load %arg13[%c0_163, %c273_164] : memref<8x290xf32, #tpu.memory_space<vmem>>, vector<8x17xf32>
    tpu.vector_store %arg13[%c0_163, %c273_164], %231 {strides = array<i32>} : memref<8x290xf32, #tpu.memory_space<vmem>>, vector<8x17xf32>,
    %c0_165 = arith.constant 0 : index
    %c17_166 = arith.constant 17 : index
    %233 = vector.load %arg13[%c0_165, %c17_166] : memref<8x290xf32, #tpu.memory_space<vmem>>, vector<8x256xf32>
    tpu.vector_store %arg13[%c0_165, %c17_166], %29 {strides = array<i32>} : memref<8x290xf32, #tpu.memory_space<vmem>>, vector<8x256xf32>,
    %c0_167 = arith.constant 0 : index
    %c0_168 = arith.constant 0 : index
    %234 = vector.load %arg13[%c0_167, %c0_168] : memref<8x290xf32, #tpu.memory_space<vmem>>, vector<8x256xf32>
    %235 = vector.broadcast %49 : vector<1x256xf32> to vector<8x256xf32>
    %236 = arith.mulf %234, %235 : vector<8x256xf32>
    %c0_169 = arith.constant 0 : index
    %c1_170 = arith.constant 1 : index
    %237 = vector.load %arg13[%c0_169, %c1_170] : memref<8x290xf32, #tpu.memory_space<vmem>>, vector<8x256xf32>
    %238 = arith.maximumf %236, %237 : vector<8x256xf32>
    %c0_171 = arith.constant 0 : index
    %c2_172 = arith.constant 2 : index
    %239 = vector.load %arg13[%c0_171, %c2_172] : memref<8x290xf32, #tpu.memory_space<vmem>>, vector<8x256xf32>
    %240 = vector.broadcast %66 : vector<1x256xf32> to vector<8x256xf32>
    %241 = arith.mulf %239, %240 : vector<8x256xf32>
    %242 = arith.maximumf %238, %241 : vector<8x256xf32>
    %c0_173 = arith.constant 0 : index
    %c16_174 = arith.constant 16 : index
    %243 = vector.load %arg13[%c0_173, %c16_174] : memref<8x290xf32, #tpu.memory_space<vmem>>, vector<8x256xf32>
    %244 = vector.broadcast %49 : vector<1x256xf32> to vector<8x256xf32>
    %245 = arith.mulf %243, %244 : vector<8x256xf32>
    %246 = arith.maximumf %242, %245 : vector<8x256xf32>
    %c0_175 = arith.constant 0 : index
    %c17_176 = arith.constant 17 : index
    %247 = vector.load %arg13[%c0_175, %c17_176] : memref<8x290xf32, #tpu.memory_space<vmem>>, vector<8x256xf32>
    %248 = arith.maximumf %246, %247 : vector<8x256xf32>
    %c0_177 = arith.constant 0 : index
    %c18_178 = arith.constant 18 : index
    %249 = vector.load %arg13[%c0_177, %c18_178] : memref<8x290xf32, #tpu.memory_space<vmem>>, vector<8x256xf32>
    %250 = vector.broadcast %66 : vector<1x256xf32> to vector<8x256xf32>
    %251 = arith.mulf %249, %250 : vector<8x256xf32>
    %252 = arith.maximumf %248, %251 : vector<8x256xf32>
    %c0_179 = arith.constant 0 : index
    %c32_180 = arith.constant 32 : index
    %253 = vector.load %arg13[%c0_179, %c32_180] : memref<8x290xf32, #tpu.memory_space<vmem>>, vector<8x256xf32>
    %254 = vector.broadcast %49 : vector<1x256xf32> to vector<8x256xf32>
    %255 = arith.mulf %253, %254 : vector<8x256xf32>
    %256 = arith.maximumf %252, %255 : vector<8x256xf32>
    %c0_181 = arith.constant 0 : index
    %c33_182 = arith.constant 33 : index
    %257 = vector.load %arg13[%c0_181, %c33_182] : memref<8x290xf32, #tpu.memory_space<vmem>>, vector<8x256xf32>
    %258 = arith.maximumf %256, %257 : vector<8x256xf32>
    %c0_183 = arith.constant 0 : index
    %c34_184 = arith.constant 34 : index
    %259 = vector.load %arg13[%c0_183, %c34_184] : memref<8x290xf32, #tpu.memory_space<vmem>>, vector<8x256xf32>
    %260 = vector.broadcast %66 : vector<1x256xf32> to vector<8x256xf32>
    %261 = arith.mulf %259, %260 : vector<8x256xf32>
    %262 = arith.maximumf %258, %261 : vector<8x256xf32>
    %c0_185 = arith.constant 0 : index
    %c24_186 = arith.constant 24 : index
    %c0_187 = arith.constant 0 : index
    %263 = vector.load %arg8[%c0_185, %c24_186, %c0_187] : memref<1x32x256xf32, #tpu.memory_space<vmem>>, vector<1x8x256xf32>
    %264 = vector.shape_cast %263 : vector<1x8x256xf32> to vector<8x256xf32>
    %265 = vector.shape_cast %262 : vector<8x256xf32> to vector<1x8x256xf32>
    tpu.vector_store %arg8[%c0_185, %c24_186, %c0_187], %265 {strides = array<i32>} : memref<1x32x256xf32, #tpu.memory_space<vmem>>, vector<1x8x256xf32>,
    return
  }
  func.func @transform_0(%arg0: i32) -> (i32, i32, i32) {
    %c0_i32 = arith.constant 0 : i32
    %c0_i32_0 = arith.constant 0 : i32
    %c0_i32_1 = arith.constant 0 : i32
    return %arg0, %c0_i32, %c0_i32_0 : i32, i32, i32
  }
  func.func @transform_1(%arg0: i32) -> (i32, i32) {
    %c0_i32 = arith.constant 0 : i32
    %c0_i32_0 = arith.constant 0 : i32
    %c0_i32_1 = arith.constant 0 : i32
    return %c0_i32, %c0_i32_0 : i32, i32
  }
  func.func @transform_2(%arg0: i32) -> (i32, i32) {
    %c0_i32 = arith.constant 0 : i32
    %c0_i32_0 = arith.constant 0 : i32
    %c0_i32_1 = arith.constant 0 : i32
    return %c0_i32, %c0_i32_0 : i32, i32
  }
  func.func @transform_3(%arg0: i32) -> (i32, i32) {
    %c0_i32 = arith.constant 0 : i32
    %c0_i32_0 = arith.constant 0 : i32
    %c0_i32_1 = arith.constant 0 : i32
    return %c0_i32, %c0_i32_0 : i32, i32
  }
  func.func @transform_4(%arg0: i32) -> (i32, i32) {
    %c0_i32 = arith.constant 0 : i32
    %c0_i32_0 = arith.constant 0 : i32
    %c0_i32_1 = arith.constant 0 : i32
    return %c0_i32, %c0_i32_0 : i32, i32
  }
  func.func @transform_5(%arg0: i32) -> (i32, i32) {
    %c0_i32 = arith.constant 0 : i32
    %c0_i32_0 = arith.constant 0 : i32
    %c0_i32_1 = arith.constant 0 : i32
    return %c0_i32, %c0_i32_0 : i32, i32
  }
  func.func @transform_6(%arg0: i32) -> (i32, i32) {
    %c0_i32 = arith.constant 0 : i32
    %c0_i32_0 = arith.constant 0 : i32
    %c0_i32_1 = arith.constant 0 : i32
    return %c0_i32, %c0_i32_0 : i32, i32
  }
  func.func @transform_7(%arg0: i32) -> (i32, i32, i32) {
    %c0_i32 = arith.constant 0 : i32
    %c0_i32_0 = arith.constant 0 : i32
    %c0_i32_1 = arith.constant 0 : i32
    return %arg0, %c0_i32, %c0_i32_0 : i32, i32, i32
  }
}

</mosaic_0001>

<llo_original>
// kernel: tpu_custom_call.1
$region0: #{tpu_custom_call.1}
  #allocation0 [shape = 'u32[]', space=smem, size = 0x4, offset = 0x4, fixed_abs, tag = 'smem constant byte address 0x4 - core index']
  #allocation1 [shape = 'u32[72,128]{1,0:T(1,128)}', space=vmem, size = 0x9000, scoped, tag = 'internal scratch']
  #allocation2 [shape = 'f32[4,290]{1,0:T(4,128)}', space=vmem, size = 0x1800, scoped, tag = 'scratch operand']
  #allocation3 [shape = 'f32[36,256]{1,0:T(8,128)}', space=vmem, size = 0xa000, scoped, tag = 'scratch operand']
  #allocation4 [shape = 'f32[4,324]{1,0:T(4,128)}', space=vmem, size = 0x1800, scoped, tag = 'scratch operand']
  #allocation5 [shape = 'f32[100,256]{1,0:T(8,128)}', space=vmem, size = 0x1a000, scoped, tag = 'scratch operand']
  #allocation6 [shape = 'f32[8,290]{1,0:T(8,128)}', space=vmem, size = 0x3000, scoped, tag = 'scratch operand']
  %s0 = inlined_call_operand.vmem [shape: f32[2,4,256], index: 0, kind: input, shape index: {}]
  %s1 = inlined_call_operand.vmem [shape: f32[24,4], index: 1, kind: input, shape index: {}]
  %s2 = inlined_call_operand.vmem [shape: f32[24,1], index: 2, kind: input, shape index: {}]
  %s3 = inlined_call_operand.vmem [shape: f32[8,36], index: 3, kind: input, shape index: {}]
  %s4 = inlined_call_operand.vmem [shape: f32[8,1], index: 4, kind: input, shape index: {}]
  %s5 = inlined_call_operand.vmem [shape: f32[8,100], index: 5, kind: input, shape index: {}]
  %s6 = inlined_call_operand.vmem [shape: f32[8,1], index: 6, kind: input, shape index: {}]
  %s7 = inlined_call_operand.hbm [shape: f32[2,32,256], index: 7, kind: output, shape index: {}]
  %s8 = sld [smem:[#allocation0]]
  $region61: #{tpu_custom_call.1} parent=0
    _
  %s10 = ssub.s32 1, %s8
  %s11 = scalar_select 0, %s10, %s8
  $region1: #{tpu_custom_call.1} parent=0
    #allocation7 [shape = 'u8[65536]{0}', space=vmem, size = 0x10000, scoped, tag = 'output window, operand 0']
    #allocation8 [shape = 's32[2]{0}', space=sflag, size = 0x8, scoped, tag = 'scoped memory for tpu_custom_call.1']
    %12 = vsyncpa [#allocation8], 0
    %s13 = scalar_lea.sflag [#allocation8], 1
    %14 = vsyncpa %s13, 0
    loop: start=0, step=1, limit=4
    $region2: #{tpu_custom_call.1} parent=1 // loop_pre_header
      _
    $region3: #{tpu_custom_call.1} parent=1 // loop_header
      %s16 = sphi 0, %s20
      %p17 = scmp.ge.s32.totalorder %s16, 4
      %s26 = sphi 0, %s28
      %s29 = sphi 0, %s26
      %s30 = sphi 0, %s29
      %s46 = sphi 0, %s30
      %s50 = sphi 0, %s50
      %s52 = sphi 0, %s50
      %s53 = sphi 0, %s52
      %s67 = sphi 0, %s53
      %s71 = sphi 0, %s71
      %s73 = sphi 0, %s71
      %s74 = sphi 0, %s73
      %s88 = sphi 0, %s74
      %s92 = sphi 0, %s92
      %s94 = sphi 0, %s92
      %s95 = sphi 0, %s94
      %s109 = sphi 0, %s95
      %s113 = sphi 0, %s113
      %s115 = sphi 0, %s113
      %s116 = sphi 0, %s115
      %s130 = sphi 0, %s116
      %s134 = sphi 0, %s134
      %s136 = sphi 0, %s134
      %s137 = sphi 0, %s136
      %s151 = sphi 0, %s137
      %s155 = sphi 0, %s155
      %s157 = sphi 0, %s155
      %s158 = sphi 0, %s157
      %s172 = sphi 0, %s158
      %s178 = sphi 0, %s180
      %s181 = sphi 0, %s178
      %s182 = sphi 0, %s181
      %s198 = sphi 0, %s182
    $region4: #{tpu_custom_call.1} parent=1 // loop_header_branch
      %19 = sbr.rel (%p17) target = $region8
    $region5: #{tpu_custom_call.1} parent=1 // loop_body
      %s21 = ssub.s32 %s16, 1
      %s22 = ssub.s32 %s16, 2
      %s23 = sadd.s32 %s16, 1
      %s24 = ssub.s32 %s16, %s23
      %p25 = scmp.eq.s32.totalorder %s24, 0
      %s27 = sadd.s32 %s26, 1
      %s28 = scalar_select %p25, %s26, %s27
      %p31 = pneg %p25
      %p32 = scmp.eq.s32.totalorder %s16, 1
      %p33 = por %p31, %p32
      %p34 = scmp.ne.s32.totalorder %s26, %s29
      %p35 = scmp.eq.s32.totalorder %s16, 0
      %p36 = por %p34, %p35
      %p37 = scmp.ne.s32.totalorder %s26, %s29
      %p38 = scmp.eq.s32.totalorder %s21, 1
      %p39 = por %p37, %p38
      %p40 = scmp.ne.s32.totalorder %s29, %s30
      %p41 = scmp.eq.s32.totalorder %s21, 0
      %p42 = por %p40, %p41
      %p43 = scmp.ne.s32.totalorder %s29, %s30
      %p44 = scmp.eq.s32.totalorder %s22, 1
      %p45 = por %p43, %p44
      %p47 = scmp.ne.s32.totalorder %s30, %s46
      %p48 = scmp.eq.s32.totalorder %s22, 0
      %p49 = por %p47, %p48
      %s51 = sadd.s32 %s50, 1
      %p54 = scmp.eq.s32.totalorder %s16, 1
      %p55 = scmp.ne.s32.totalorder %s50, %s52
      %p56 = scmp.eq.s32.totalorder %s16, 0
      %p57 = por %p55, %p56
      %p58 = scmp.ne.s32.totalorder %s50, %s52
      %p59 = scmp.eq.s32.totalorder %s21, 1
      %p60 = por %p58, %p59
      %p61 = scmp.ne.s32.totalorder %s52, %s53
      %p62 = scmp.eq.s32.totalorder %s21, 0
      %p63 = por %p61, %p62
      %p64 = scmp.ne.s32.totalorder %s52, %s53
      %p65 = scmp.eq.s32.totalorder %s22, 1
      %p66 = por %p64, %p65
      %p68 = scmp.ne.s32.totalorder %s53, %s67
      %p69 = scmp.eq.s32.totalorder %s22, 0
      %p70 = por %p68, %p69
      %s72 = sadd.s32 %s71, 1
      %p75 = scmp.eq.s32.totalorder %s16, 1
      %p76 = scmp.ne.s32.totalorder %s71, %s73
      %p77 = scmp.eq.s32.totalorder %s16, 0
      %p78 = por %p76, %p77
      %p79 = scmp.ne.s32.totalorder %s71, %s73
      %p80 = scmp.eq.s32.totalorder %s21, 1
      %p81 = por %p79, %p80
      %p82 = scmp.ne.s32.totalorder %s73, %s74
      %p83 = scmp.eq.s32.totalorder %s21, 0
      %p84 = por %p82, %p83
      %p85 = scmp.ne.s32.totalorder %s73, %s74
      %p86 = scmp.eq.s32.totalorder %s22, 1
      %p87 = por %p85, %p86
      %p89 = scmp.ne.s32.totalorder %s74, %s88
      %p90 = scmp.eq.s32.totalorder %s22, 0
      %p91 = por %p89, %p90
      %s93 = sadd.s32 %s92, 1
      %p96 = scmp.eq.s32.totalorder %s16, 1
      %p97 = scmp.ne.s32.totalorder %s92, %s94
      %p98 = scmp.eq.s32.totalorder %s16, 0
      %p99 = por %p97, %p98
      %p100 = scmp.ne.s32.totalorder %s92, %s94
      %p101 = scmp.eq.s32.totalorder %s21, 1
      %p102 = por %p100, %p101
      %p103 = scmp.ne.s32.totalorder %s94, %s95
      %p104 = scmp.eq.s32.totalorder %s21, 0
      %p105 = por %p103, %p104
      %p106 = scmp.ne.s32.totalorder %s94, %s95
      %p107 = scmp.eq.s32.totalorder %s22, 1
      %p108 = por %p106, %p107
      %p110 = scmp.ne.s32.totalorder %s95, %s109
      %p111 = scmp.eq.s32.totalorder %s22, 0
      %p112 = por %p110, %p111
      %s114 = sadd.s32 %s113, 1
      %p117 = scmp.eq.s32.totalorder %s16, 1
      %p118 = scmp.ne.s32.totalorder %s113, %s115
      %p119 = scmp.eq.s32.totalorder %s16, 0
      %p120 = por %p118, %p119
      %p121 = scmp.ne.s32.totalorder %s113, %s115
      %p122 = scmp.eq.s32.totalorder %s21, 1
      %p123 = por %p121, %p122
      %p124 = scmp.ne.s32.totalorder %s115, %s116
      %p125 = scmp.eq.s32.totalorder %s21, 0
      %p126 = por %p124, %p125
      %p127 = scmp.ne.s32.totalorder %s115, %s116
      %p128 = scmp.eq.s32.totalorder %s22, 1
      %p129 = por %p127, %p128
      %p131 = scmp.ne.s32.totalorder %s116, %s130
      %p132 = scmp.eq.s32.totalorder %s22, 0
      %p133 = por %p131, %p132
      %s135 = sadd.s32 %s134, 1
      %p138 = scmp.eq.s32.totalorder %s16, 1
      %p139 = scmp.ne.s32.totalorder %s134, %s136
      %p140 = scmp.eq.s32.totalorder %s16, 0
      %p141 = por %p139, %p140
      %p142 = scmp.ne.s32.totalorder %s134, %s136
      %p143 = scmp.eq.s32.totalorder %s21, 1
      %p144 = por %p142, %p143
      %p145 = scmp.ne.s32.totalorder %s136, %s137
      %p146 = scmp.eq.s32.totalorder %s21, 0
      %p147 = por %p145, %p146
      %p148 = scmp.ne.s32.totalorder %s136, %s137
      %p149 = scmp.eq.s32.totalorder %s22, 1
      %p150 = por %p148, %p149
      %p152 = scmp.ne.s32.totalorder %s137, %s151
      %p153 = scmp.eq.s32.totalorder %s22, 0
      %p154 = por %p152, %p153
      %s156 = sadd.s32 %s155, 1
      %p159 = scmp.eq.s32.totalorder %s16, 1
      %p160 = scmp.ne.s32.totalorder %s155, %s157
      %p161 = scmp.eq.s32.totalorder %s16, 0
      %p162 = por %p160, %p161
      %p163 = scmp.ne.s32.totalorder %s155, %s157
      %p164 = scmp.eq.s32.totalorder %s21, 1
      %p165 = por %p163, %p164
      %p166 = scmp.ne.s32.totalorder %s157, %s158
      %p167 = scmp.eq.s32.totalorder %s21, 0
      %p168 = por %p166, %p167
      %p169 = scmp.ne.s32.totalorder %s157, %s158
      %p170 = scmp.eq.s32.totalorder %s22, 1
      %p171 = por %p169, %p170
      %p173 = scmp.ne.s32.totalorder %s158, %s172
      %p174 = scmp.eq.s32.totalorder %s22, 0
      %p175 = por %p173, %p174
      %s176 = ssub.s32 %s16, %s23
      %p177 = scmp.eq.s32.totalorder %s176, 0
      %s179 = sadd.s32 %s178, 1
      %s180 = scalar_select %p177, %s178, %s179
      %p183 = pneg %p177
      %p184 = scmp.eq.s32.totalorder %s16, 1
      %p185 = por %p183, %p184
      %p186 = scmp.ne.s32.totalorder %s178, %s181
      %p187 = scmp.eq.s32.totalorder %s16, 0
      %p188 = por %p186, %p187
      %p189 = scmp.ne.s32.totalorder %s178, %s181
      %p190 = scmp.eq.s32.totalorder %s21, 1
      %p191 = por %p189, %p190
      %p192 = scmp.ne.s32.totalorder %s181, %s182
      %p193 = scmp.eq.s32.totalorder %s21, 0
      %p194 = por %p192, %p193
      %p195 = scmp.ne.s32.totalorder %s181, %s182
      %p196 = scmp.eq.s32.totalorder %s22, 1
      %p197 = por %p195, %p196
      %p199 = scmp.ne.s32.totalorder %s182, %s198
      %p200 = scmp.eq.s32.totalorder %s22, 0
      %p201 = por %p199, %p200
      %p202 = scmp.le.s32.totalorder 1, %s16
      %p203 = scmp.lt.s32.totalorder %s16, 3
      %p204 = pnand %p202, %p203
      %p205 = pneg %p204
      // Predicated region
      $region9: #{tpu_custom_call.1} parent=5 // pred_check
        _
      $region10: #{tpu_custom_call.1} parent=5 // pred_check_branch
        %207 = sbr.rel (%p204) target = $region12
      $region11: #{tpu_custom_call.1} parent=5 // pred_region
        %s208 = ssub.s32 %s16, 1
        // Predicated region
        $region13: #{tpu_custom_call.1} parent=11 // pred_check
          %p209 = pneg %p63
        $region14: #{tpu_custom_call.1} parent=11 // pred_check_branch
          %211 = sbr.rel (%p209) target = $region16
        $region15: #{tpu_custom_call.1} parent=11 // pred_region
          _
        $region16: #{tpu_custom_call.1} parent=11 // pred_fallthru
          _
        // Predicated region
        $region17: #{tpu_custom_call.1} parent=11 // pred_check
          %p212 = pneg %p84
        $region18: #{tpu_custom_call.1} parent=11 // pred_check_branch
          %214 = sbr.rel (%p212) target = $region20
        $region19: #{tpu_custom_call.1} parent=11 // pred_region
          _
        $region20: #{tpu_custom_call.1} parent=11 // pred_fallthru
          _
        // Predicated region
        $region21: #{tpu_custom_call.1} parent=11 // pred_check
          %p215 = pneg %p105
        $region22: #{tpu_custom_call.1} parent=11 // pred_check_branch
          %217 = sbr.rel (%p215) target = $region24
        $region23: #{tpu_custom_call.1} parent=11 // pred_region
          _
        $region24: #{tpu_custom_call.1} parent=11 // pred_fallthru
          _
        // Predicated region
        $region25: #{tpu_custom_call.1} parent=11 // pred_check
          %p218 = pneg %p126
        $region26: #{tpu_custom_call.1} parent=11 // pred_check_branch
          %220 = sbr.rel (%p218) target = $region28
        $region27: #{tpu_custom_call.1} parent=11 // pred_region
          _
        $region28: #{tpu_custom_call.1} parent=11 // pred_fallthru
          _
        // Predicated region
        $region29: #{tpu_custom_call.1} parent=11 // pred_check
          %p221 = pneg %p147
        $region30: #{tpu_custom_call.1} parent=11 // pred_check_branch
          %223 = sbr.rel (%p221) target = $region32
        $region31: #{tpu_custom_call.1} parent=11 // pred_region
          _
        $region32: #{tpu_custom_call.1} parent=11 // pred_fallthru
          _
        // Predicated region
        $region33: #{tpu_custom_call.1} parent=11 // pred_check
          %p224 = pneg %p168
        $region34: #{tpu_custom_call.1} parent=11 // pred_check_branch
          %226 = sbr.rel (%p224) target = $region36
        $region35: #{tpu_custom_call.1} parent=11 // pred_region
          _
        $region36: #{tpu_custom_call.1} parent=11 // pred_fallthru
          _
      $region12: #{tpu_custom_call.1} parent=5 // pred_fallthru
        _
      %p227 = scmp.lt.s32.totalorder %s16, 2
      // Predicated region
      $region37: #{tpu_custom_call.1} parent=5 // pred_check
        %p228 = pneg %p227
      $region38: #{tpu_custom_call.1} parent=5 // pred_check_branch
        %230 = sbr.rel (%p228) target = $region40
      $region39: #{tpu_custom_call.1} parent=5 // pred_region
        // Predicated region
        $region41: #{tpu_custom_call.1} parent=39 // pred_check
          %p231 = pneg %p36
        $region42: #{tpu_custom_call.1} parent=39 // pred_check_branch
          %233 = sbr.rel (%p231) target = $region44
        $region43: #{tpu_custom_call.1} parent=39 // pred_region
          %p234 = scmp.lt.s32.totalorder %s16, 1
          %s235 = scalar_select %p234, %s16, 1
          %s236 = smul.addr %s235, 2
          %s237 = smul.addr %s236, 4
          %s238 = scalar_lea.vmem %s0, %s237
        $region44: #{tpu_custom_call.1} parent=39 // pred_fallthru
          _
      $region40: #{tpu_custom_call.1} parent=5 // pred_fallthru
        _
      %p239 = scmp.le.s32.totalorder 1, %s16
      %p240 = scmp.lt.s32.totalorder %s16, 3
      %p241 = pnand %p239, %p240
      %p242 = pneg %p241
      // Predicated region
      $region45: #{tpu_custom_call.1} parent=5 // pred_check
        _
      $region46: #{tpu_custom_call.1} parent=5 // pred_check_branch
        %244 = sbr.rel (%p241) target = $region48
      $region47: #{tpu_custom_call.1} parent=5 // pred_region
        %s245 = ssub.s32 %s16, 1
        %p246 = scmp.lt.s32.totalorder %s21, 1
        %s247 = scalar_select %p246, %s21, 1
        %s248 = smul.addr %s247, 2
        %s249 = smul.addr %s248, 4
        %s250 = scalar_lea.vmem %s0, %s249
        %p251 = pneg %p42
        %p252 = pneg %p39
        %p253 = pneg %p63
        %p254 = pneg %p60
        %p255 = pneg %p84
        %p256 = pneg %p81
        %p257 = pneg %p105
        %p258 = pneg %p102
        %p259 = pneg %p126
        %p260 = pneg %p123
        %p261 = pneg %p147
        %p262 = pneg %p144
        %p263 = pneg %p168
        %p264 = pneg %p165
        %p265 = pneg %p194
        %p266 = pneg %p191
        %s267 = sand.u32 %s181, 1
        %s268 = scalar_lea.sflag [#allocation8], %s267
        %s269 = sand.u32 %s181, 1
        %s270 = smul.addr %s269, 64
        %s271 = scalar_lea.vmem [#allocation7], %s270
        %p272 = scmp.lt.s32.totalorder %s21, 1
        %s273 = scalar_select %p272, %s21, 1
        %s274 = smul.addr %s273, 2
        %s275 = smul.addr %s274, 4
        %s276 = scalar_lea.vmem %s0, %s275
        %v277 = vld [vmem:[%s276] sm:$0xff]
        %v278 = vlaneseq
        %v279 = vand.u32 %v278, 127
        %v280 = vadd.s32 %v279, 128
        %vm281 = vcmp.lt.s32.totalorder %v279, 0
        %v282 = vsub.s32 0, %v279
        %v283 = vsel %vm281, %v282, %v279
        %v284 = vshrl.u32 %v283, 4
        %v285 = vand.u32 %v283, 15
        %v286 = vsub.s32 0, %v285
        %v287 = vsel %vm281, %v286, %v285
        %vm288 = vcmp.lt.s32.totalorder %v280, 0
        %v289 = vsub.s32 0, %v280
        %v290 = vsel %vm288, %v289, %v280
        %v291 = vshrl.u32 %v290, 4
        %v292 = vand.u32 %v290, 15
        %v293 = vsub.s32 0, %v292
        %v294 = vsel %vm288, %v293, %v292
        %vm295 = vcmp.ne.s32.totalorder %v287, 0
        %vm296 = vcmp.ne.s32.totalorder %v294, 0
        %vm297 = vcmp.lt.s32.totalorder %v287, 0
        %vm298 = vcmp.lt.s32.totalorder %v294, 0
        %vm299 = vmand %vm297, %vm295
        %vm300 = vmand %vm298, %vm296
        %v301 = vadd.s32 %v287, 16
        %v302 = vadd.s32 %v294, 16
        %v303 = vsel %vm299, %v301, %v287
        %v304 = vsel %vm300, %v302, %v294
        %v305 = vld [vmem:[%s1] sm:$0xff]
        %v306 = vld [vmem:[%s1 + $0x8] sm:$0xff]
        %v307 = vld [vmem:[%s1 + $0x10] sm:$0xff]
        %v308 = vld [vmem:[%s2] sm:$0xff]
        %v309 = vld [vmem:[%s2 + $0x8] sm:$0xff]
        %v310 = vld [vmem:[%s2 + $0x10] sm:$0xff]
        %312 = vset.pattern.permute.xlu0 0
        %313 = vperm.xlu0 %312, %v308
        %v314 = vpop.permute.xlu0 %313
        %317 = vset.pattern.permute.xlu0 0
        %318 = vperm.xlu0 %317, %v309
        %v319 = vpop.permute.xlu0 %318
        %322 = vset.pattern.permute.xlu0 0
        %323 = vperm.xlu0 %322, %v310
        %v324 = vpop.permute.xlu0 %323
        %327 = vst [vmem:[#allocation1] ss:$2 sm:$0xff] %v277
        %v328 = vld.sshfl [vmem:[#allocation1] sm:$0xff pattern:$0x75316420]
        %v329 = vld.sshfl [vmem:[#allocation1 + $0x8] sm:$0xff pattern:$0x75316420]
        %vm330 = vcmask 31744
        %v332 = vsel %vm330, %v305, 0
        %v335 = vsel %vm330, %v306, 0
        %v338 = vsel %vm330, %v307, 0
        %vm340 = vcmask 1043456
        %v341 = vsel %vm340, %v328, 0
        %v343 = vsel %vm340, %v329, 0
        %345 = vmatpush.msra.mxu0 0.0
        %346 = vmatpush.msra.mxu0 0.0
        %347 = vmatpush.msra.mxu0 0.0
        %348 = vmatpush.msra.mxu0 0.0
        %349 = vmatpush.msra.mxu0 0.0
        %350 = vmatpush.msra.mxu0 0.0
        %351 = vmatpush.msra.mxu0 0.0
        %352 = vmatpush.msra.mxu0 0.0
        %353 = vmatpush.msra.mxu0 0.0
        %354 = vmatpush.msra.mxu0 0.0
        %355 = vmatpush.msra.mxu0 0.0
        %356 = vmatpush.msra.mxu0 0.0
        %357 = vmatpush.msra.mxu0 0.0
        %358 = vmatpush.msra.mxu0 0.0
        %359 = vmatpush.msra.mxu0 0.0
        %360 = vmatpush.msra.mxu0 %v341
        %361 = vmatmul.f32.gmra.mxu0 %v332
        %v362 = vpop.f32.mrf.mxu0
        %v363 = vadd.f32 %v314, %v362
        %364 = vmatmul.f32.gmra.mxu0 %v335
        %v365 = vpop.f32.mrf.mxu0
        %v366 = vadd.f32 %v319, %v365
        %367 = vmatmul.f32.gmra.mxu0 %v338
        %v368 = vpop.f32.mrf.mxu0
        %v369 = vadd.f32 %v324, %v368
        %370 = vdwg.mxu0
        %371 = vmatpush.msra.mxu0 0.0
        %372 = vmatpush.msra.mxu0 0.0
        %373 = vmatpush.msra.mxu0 0.0
        %374 = vmatpush.msra.mxu0 0.0
        %375 = vmatpush.msra.mxu0 0.0
        %376 = vmatpush.msra.mxu0 0.0
        %377 = vmatpush.msra.mxu0 0.0
        %378 = vmatpush.msra.mxu0 0.0
        %379 = vmatpush.msra.mxu0 0.0
        %380 = vmatpush.msra.mxu0 0.0
        %381 = vmatpush.msra.mxu0 0.0
        %382 = vmatpush.msra.mxu0 0.0
        %383 = vmatpush.msra.mxu0 0.0
        %384 = vmatpush.msra.mxu0 0.0
        %385 = vmatpush.msra.mxu0 0.0
        %386 = vmatpush.msra.mxu0 %v343
        %387 = vmatmul.f32.gmra.mxu0 %v332
        %v388 = vpop.f32.mrf.mxu0
        %v389 = vadd.f32 %v314, %v388
        %390 = vmatmul.f32.gmra.mxu0 %v335
        %v391 = vpop.f32.mrf.mxu0
        %v392 = vadd.f32 %v319, %v391
        %393 = vmatmul.f32.gmra.mxu0 %v338
        %v394 = vpop.f32.mrf.mxu0
        %v395 = vadd.f32 %v324, %v394
        %396 = vdwg.mxu0
        %v397 = vmax.f32 %v363, 0.0
        %v398 = vmax.f32 %v389, 0.0
        %v399 = vmax.f32 %v366, 0.0
        %v400 = vmax.f32 %v392, 0.0
        %v401 = vmax.f32 %v369, 0.0
        %v402 = vmax.f32 %v395, 0.0
        %403 = vst [vmem:[%s271] sm:$0xff] %v397
        %404 = vst [vmem:[%s271 + $0x8] sm:$0xff] %v398
        %vm405 = vcmask 134144
        %406 = vst.msk [vmem:[#allocation2] sm:$0xf] %vm405, 0.0
        %vm407 = vcmask 273544
        %408 = vst.msk [vmem:[#allocation2 + $0x8] sm:$0xf] %vm407, 0.0
        %v411 = vrot.slane %v400, 4
        %v412 = vsel %vm340, %v399, %v411
        %413 = vrot.lane.b32.xlu0 %v412, 17
        %v414 = vpop.permute.xlu0 %413
        %v415 = vrot.slane %v414, 4
        %vm416 = vcmask 138240
        %v417 = vsel %vm416, %v415, %v414
        %vm420 = vcmask 1043592
        %vm421 = vcmask 1047556
        %vm422 = vmor %vm421, %vm420
        %423 = vst.msk [vmem:[#allocation2] sm:$0xff] %vm422, %v417
        %424 = vst.msk [vmem:[#allocation2 + $0x8] sm:$0xf] %vm405, %v415
        %v425 = vld [vmem:[#allocation2] sm:$0xff]
        %v426 = vadd.s32 %v303, 4294967295
        %v427 = vadd.s32 %v304, 4294967295
        %vm428 = vcmp.ge.s32.totalorder %v426, 0
        %vm429 = vcmp.ge.s32.totalorder %v427, 0
        %vm430 = vcmp.lt.s32.totalorder %v426, 16
        %vm431 = vcmp.lt.s32.totalorder %v427, 16
        %vm432 = vmand %vm428, %vm430
        %vm433 = vmand %vm429, %vm431
        %v434 = vsel %vm432, 1, 0
        %v435 = vsel %vm433, 1, 0
        %v436 = vcvt.s32.f32 %v434
        %v437 = vcvt.s32.f32 %v435
        %v440 = vrot.slane %v437, 4
        %v441 = vsel %vm340, %v436, %v440
        %v443 = vmul.f32 %v425, %v441
        %445 = vst [vmem:[#allocation1] ss:$2 sm:$0xff] %v443
        %v446 = vld.sshfl [vmem:[#allocation1] sm:$0xff pattern:$0x75316420]
        %v447 = vld.sshfl [vmem:[#allocation1 + $0x8] sm:$0xff pattern:$0x75316420]
        %450 = vst [vmem:[#allocation3] sm:$0xf] %v446
        %451 = vst [vmem:[#allocation3 + $0x8] sm:$0xf] %v447
        %v452 = vld [vmem:[#allocation2] sm:$0xff]
        %v453 = vld [vmem:[#allocation2 + $0x8] sm:$0xf]
        %s456 = scalar_lea.vmem [#allocation1], 1
        %457 = vst [vmem:[%s456] ss:$2 sm:$0xff] %v452
        %s458 = scalar_lea.vmem [#allocation1], 17
        %459 = vst [vmem:[%s458] ss:$2 sm:$0xff] %v453
        %v460 = vld.sshfl [vmem:[#allocation1] sm:$0xff pattern:$0x75316420]
        %v461 = vld.sshfl [vmem:[#allocation1 + $0x8] sm:$0xff pattern:$0x75316420]
        %v462 = vld.sshfl [vmem:[#allocation1 + $0x10] sm:$0xff pattern:$0x75316420]
        %463 = vrot.lane.b32.xlu0 %v460, 127
        %v464 = vpop.permute.xlu0 %463
        %465 = vrot.lane.b32.xlu0 %v461, 127
        %v466 = vpop.permute.xlu0 %465
        %467 = vrot.lane.b32.xlu0 %v462, 127
        %v468 = vpop.permute.xlu0 %467
        %vm469 = vcmask 1039360
        %v470 = vsel %vm469, %v464, %v466
        %v471 = vsel %vm469, %v466, %v468
        %474 = vst [vmem:[#allocation3] sm:$0xf0] %v470
        %475 = vst [vmem:[#allocation3 + $0x8] sm:$0xf0] %v471
        %v476 = vld [vmem:[#allocation2] sm:$0xff]
        %v477 = vld [vmem:[#allocation2 + $0x8] sm:$0xf]
        %v478 = vadd.s32 %v303, 1
        %v479 = vadd.s32 %v304, 1
        %vm480 = vcmp.ge.s32.totalorder %v478, 0
        %vm481 = vcmp.ge.s32.totalorder %v479, 0
        %vm482 = vcmp.lt.s32.totalorder %v478, 16
        %vm483 = vcmp.lt.s32.totalorder %v479, 16
        %vm484 = vmand %vm480, %vm482
        %vm485 = vmand %vm481, %vm483
        %v486 = vsel %vm484, 1, 0
        %v487 = vsel %vm485, 1, 0
        %v488 = vcvt.s32.f32 %v486
        %v489 = vcvt.s32.f32 %v487
        %v492 = vrot.slane %v489, 4
        %v493 = vsel %vm340, %v488, %v492
        %494 = vrot.lane.b32.xlu0 %v493, 2
        %v495 = vpop.permute.xlu0 %494
        %v496 = vrot.slane %v495, 4
        %vm497 = vcmask 15360
        %v498 = vsel %vm497, %v496, %v495
        %v501 = vmul.f32 %v476, %v498
        %v502 = vmul.f32 %v477, %v496
        %505 = vst [vmem:[#allocation1] ss:$2 sm:$0xff] %v501
        %s506 = scalar_lea.vmem [#allocation1], 16
        %507 = vst [vmem:[%s506] ss:$2 sm:$0xff] %v502
        %v508 = vld.sshfl [vmem:[#allocation1] sm:$0xff pattern:$0x75316420]
        %v509 = vld.sshfl [vmem:[#allocation1 + $0x8] sm:$0xff pattern:$0x75316420]
        %v510 = vld.sshfl [vmem:[#allocation1 + $0x10] sm:$0xff pattern:$0x75316420]
        %511 = vrot.lane.b32.xlu0 %v508, 126
        %v512 = vpop.permute.xlu0 %511
        %513 = vrot.lane.b32.xlu0 %v509, 126
        %v514 = vpop.permute.xlu0 %513
        %515 = vrot.lane.b32.xlu0 %v510, 126
        %v516 = vpop.permute.xlu0 %515
        %vm517 = vcmask 1031168
        %v518 = vsel %vm517, %v512, %v514
        %v519 = vsel %vm517, %v514, %v516
        %522 = vst [vmem:[#allocation3 + $0x10] sm:$0xf] %v518
        %523 = vst [vmem:[#allocation3 + $0x18] sm:$0xf] %v519
        %v524 = vld [vmem:[#allocation2] sm:$0xff]
        %v525 = vld [vmem:[#allocation2 + $0x8] sm:$0xf]
        %526 = vrot.lane.b32.xlu0 %v441, 16
        %v527 = vpop.permute.xlu0 %526
        %v528 = vrot.slane %v527, 4
        %vm529 = vcmask 130048
        %v530 = vsel %vm529, %v528, %v527
        %v533 = vmul.f32 %v524, %v530
        %v534 = vmul.f32 %v525, %v528
        %s537 = scalar_lea.vmem [#allocation1], 1
        %538 = vst [vmem:[%s537] ss:$2 sm:$0xff] %v533
        %s539 = scalar_lea.vmem [#allocation1], 17
        %540 = vst [vmem:[%s539] ss:$2 sm:$0xff] %v534
        %v541 = vld.sshfl [vmem:[#allocation1] sm:$0xff pattern:$0x75316420]
        %v542 = vld.sshfl [vmem:[#allocation1 + $0x8] sm:$0xff pattern:$0x75316420]
        %v543 = vld.sshfl [vmem:[#allocation1 + $0x10] sm:$0xff pattern:$0x75316420]
        %544 = vrot.lane.b32.xlu0 %v541, 112
        %v545 = vpop.permute.xlu0 %544
        %546 = vrot.lane.b32.xlu0 %v542, 112
        %v547 = vpop.permute.xlu0 %546
        %548 = vrot.lane.b32.xlu0 %v543, 112
        %v549 = vpop.permute.xlu0 %548
        %vm550 = vcmask 916480
        %v551 = vsel %vm550, %v545, %v547
        %v552 = vsel %vm550, %v547, %v549
        %555 = vst [vmem:[#allocation3 + $0x10] sm:$0xf0] %v551
        %556 = vst [vmem:[#allocation3 + $0x18] sm:$0xf0] %v552
        %v557 = vld [vmem:[#allocation2] sm:$0xff]
        %v558 = vld [vmem:[#allocation2 + $0x8] sm:$0xf]
        %561 = vst [vmem:[#allocation1] ss:$2 sm:$0xff] %v557
        %s562 = scalar_lea.vmem [#allocation1], 16
        %563 = vst [vmem:[%s562] ss:$2 sm:$0xff] %v558
        %v564 = vld.sshfl [vmem:[#allocation1] sm:$0xff pattern:$0x75316420]
        %v565 = vld.sshfl [vmem:[#allocation1 + $0x8] sm:$0xff pattern:$0x75316420]
        %v566 = vld.sshfl [vmem:[#allocation1 + $0x10] sm:$0xff pattern:$0x75316420]
        %567 = vrot.lane.b32.xlu0 %v564, 111
        %v568 = vpop.permute.xlu0 %567
        %569 = vrot.lane.b32.xlu0 %v565, 111
        %v570 = vpop.permute.xlu0 %569
        %571 = vrot.lane.b32.xlu0 %v566, 111
        %v572 = vpop.permute.xlu0 %571
        %vm573 = vcmask 908288
        %v574 = vsel %vm573, %v568, %v570
        %v575 = vsel %vm573, %v570, %v572
        %578 = vst [vmem:[#allocation3 + $0x20] sm:$0xf] %v574
        %579 = vst [vmem:[#allocation3 + $0x28] sm:$0xf] %v575
        %v580 = vld [vmem:[#allocation2] sm:$0xff]
        %v581 = vld [vmem:[#allocation2 + $0x8] sm:$0xf]
        %582 = vrot.lane.b32.xlu0 %v493, 18
        %v583 = vpop.permute.xlu0 %582
        %v584 = vrot.slane %v583, 4
        %vm585 = vcmask 146432
        %v586 = vsel %vm585, %v584, %v583
        %v589 = vmul.f32 %v580, %v586
        %v590 = vmul.f32 %v581, %v584
        %s593 = scalar_lea.vmem [#allocation1], 1
        %594 = vst [vmem:[%s593] ss:$2 sm:$0xff] %v589
        %s595 = scalar_lea.vmem [#allocation1], 17
        %596 = vst [vmem:[%s595] ss:$2 sm:$0xff] %v590
        %v597 = vld.sshfl [vmem:[#allocation1] sm:$0xff pattern:$0x75316420]
        %v598 = vld.sshfl [vmem:[#allocation1 + $0x8] sm:$0xff pattern:$0x75316420]
        %v599 = vld.sshfl [vmem:[#allocation1 + $0x10] sm:$0xff pattern:$0x75316420]
        %600 = vrot.lane.b32.xlu0 %v597, 110
        %v601 = vpop.permute.xlu0 %600
        %602 = vrot.lane.b32.xlu0 %v598, 110
        %v603 = vpop.permute.xlu0 %602
        %604 = vrot.lane.b32.xlu0 %v599, 110
        %v605 = vpop.permute.xlu0 %604
        %vm606 = vcmask 900096
        %v607 = vsel %vm606, %v601, %v603
        %v608 = vsel %vm606, %v603, %v605
        %611 = vst [vmem:[#allocation3 + $0x20] sm:$0xf0] %v607
        %612 = vst [vmem:[#allocation3 + $0x28] sm:$0xf0] %v608
        %v613 = vld [vmem:[#allocation2] sm:$0xff]
        %v614 = vld [vmem:[#allocation2 + $0x8] sm:$0xf]
        %615 = vrot.lane.b32.xlu0 %v441, 32
        %v616 = vpop.permute.xlu0 %615
        %v617 = vrot.slane %v616, 4
        %vm618 = vcmask 261120
        %v619 = vsel %vm618, %v617, %v616
        %v622 = vmul.f32 %v613, %v619
        %v623 = vmul.f32 %v614, %v617
        %626 = vst [vmem:[#allocation1] ss:$2 sm:$0xff] %v622
        %s627 = scalar_lea.vmem [#allocation1], 16
        %628 = vst [vmem:[%s627] ss:$2 sm:$0xff] %v623
        %v629 = vld.sshfl [vmem:[#allocation1] sm:$0xff pattern:$0x75316420]
        %v630 = vld.sshfl [vmem:[#allocation1 + $0x8] sm:$0xff pattern:$0x75316420]
        %v631 = vld.sshfl [vmem:[#allocation1 + $0x10] sm:$0xff pattern:$0x75316420]
        %632 = vrot.lane.b32.xlu0 %v629, 96
        %v633 = vpop.permute.xlu0 %632
        %634 = vrot.lane.b32.xlu0 %v630, 96
        %v635 = vpop.permute.xlu0 %634
        %636 = vrot.lane.b32.xlu0 %v631, 96
        %v637 = vpop.permute.xlu0 %636
        %vm638 = vcmask 785408
        %v639 = vsel %vm638, %v633, %v635
        %v640 = vsel %vm638, %v635, %v637
        %643 = vst [vmem:[#allocation3 + $0x30] sm:$0xf] %v639
        %644 = vst [vmem:[#allocation3 + $0x38] sm:$0xf] %v640
        %v645 = vld [vmem:[#allocation2] sm:$0xff]
        %v646 = vld [vmem:[#allocation2 + $0x8] sm:$0xf]
        %s649 = scalar_lea.vmem [#allocation1], 1
        %650 = vst [vmem:[%s649] ss:$2 sm:$0xff] %v645
        %s651 = scalar_lea.vmem [#allocation1], 17
        %652 = vst [vmem:[%s651] ss:$2 sm:$0xff] %v646
        %v653 = vld.sshfl [vmem:[#allocation1] sm:$0xff pattern:$0x75316420]
        %v654 = vld.sshfl [vmem:[#allocation1 + $0x8] sm:$0xff pattern:$0x75316420]
        %v655 = vld.sshfl [vmem:[#allocation1 + $0x10] sm:$0xff pattern:$0x75316420]
        %656 = vrot.lane.b32.xlu0 %v653, 95
        %v657 = vpop.permute.xlu0 %656
        %658 = vrot.lane.b32.xlu0 %v654, 95
        %v659 = vpop.permute.xlu0 %658
        %660 = vrot.lane.b32.xlu0 %v655, 95
        %v661 = vpop.permute.xlu0 %660
        %vm662 = vcmask 777216
        %v663 = vsel %vm662, %v657, %v659
        %v664 = vsel %vm662, %v659, %v661
        %667 = vst [vmem:[#allocation3 + $0x30] sm:$0xf0] %v663
        %668 = vst [vmem:[#allocation3 + $0x38] sm:$0xf0] %v664
        %v669 = vld [vmem:[#allocation2] sm:$0xff]
        %v670 = vld [vmem:[#allocation2 + $0x8] sm:$0xf]
        %671 = vrot.lane.b32.xlu0 %v493, 34
        %v672 = vpop.permute.xlu0 %671
        %v673 = vrot.slane %v672, 4
        %vm674 = vcmask 277504
        %v675 = vsel %vm674, %v673, %v672
        %v678 = vmul.f32 %v669, %v675
        %v679 = vmul.f32 %v670, %v673
        %682 = vst [vmem:[#allocation1] ss:$2 sm:$0xff] %v678
        %s683 = scalar_lea.vmem [#allocation1], 16
        %684 = vst [vmem:[%s683] ss:$2 sm:$0xff] %v679
        %v685 = vld.sshfl [vmem:[#allocation1] sm:$0xff pattern:$0x75316420]
        %v686 = vld.sshfl [vmem:[#allocation1 + $0x8] sm:$0xff pattern:$0x75316420]
        %v687 = vld.sshfl [vmem:[#allocation1 + $0x10] sm:$0xff pattern:$0x75316420]
        %688 = vrot.lane.b32.xlu0 %v685, 94
        %v689 = vpop.permute.xlu0 %688
        %690 = vrot.lane.b32.xlu0 %v686, 94
        %v691 = vpop.permute.xlu0 %690
        %692 = vrot.lane.b32.xlu0 %v687, 94
        %v693 = vpop.permute.xlu0 %692
        %vm694 = vcmask 769024
        %v695 = vsel %vm694, %v689, %v691
        %v696 = vsel %vm694, %v691, %v693
        %699 = vst [vmem:[#allocation3 + $0x40] sm:$0xf] %v695
        %700 = vst [vmem:[#allocation3 + $0x48] sm:$0xf] %v696
        %v701 = vld [vmem:[%s3] sm:$0xff]
        %v702 = vld [vmem:[#allocation3] sm:$0xff]
        %v703 = vld [vmem:[#allocation3 + $0x8] sm:$0xff]
        %v704 = vld [vmem:[#allocation3 + $0x10] sm:$0xff]
        %v705 = vld [vmem:[#allocation3 + $0x18] sm:$0xff]
        %v706 = vld [vmem:[#allocation3 + $0x20] sm:$0xff]
        %v707 = vld [vmem:[#allocation3 + $0x28] sm:$0xff]
        %v708 = vld [vmem:[#allocation3 + $0x30] sm:$0xff]
        %v709 = vld [vmem:[#allocation3 + $0x38] sm:$0xff]
        %v710 = vld [vmem:[#allocation3 + $0x40] sm:$0xf]
        %v711 = vld [vmem:[#allocation3 + $0x48] sm:$0xf]
        %v712 = vld [vmem:[%s4] sm:$0xff]
        %714 = vset.pattern.permute.xlu0 0
        %715 = vperm.xlu0 %714, %v712
        %v716 = vpop.permute.xlu0 %715
        %vm718 = vcmask 293888
        %v720 = vsel %vm718, %v701, 0
        %v723 = vsel %vm340, %v710, 0
        %v726 = vsel %vm340, %v711, 0
        %728 = vmatpush.msra.mxu0 0.0
        %729 = vmatpush.msra.mxu0 0.0
        %730 = vmatpush.msra.mxu0 0.0
        %731 = vmatpush.msra.mxu0 0.0
        %732 = vmatpush.msra.mxu0 0.0
        %733 = vmatpush.msra.mxu0 0.0
        %734 = vmatpush.msra.mxu0 0.0
        %735 = vmatpush.msra.mxu0 0.0
        %736 = vmatpush.msra.mxu0 0.0
        %737 = vmatpush.msra.mxu0 0.0
        %738 = vmatpush.msra.mxu0 0.0
        %739 = vmatpush.msra.mxu0 %v723
        %740 = vmatpush.msra.mxu0 %v708
        %741 = vmatpush.msra.mxu0 %v706
        %742 = vmatpush.msra.mxu0 %v704
        %743 = vmatpush.msra.mxu0 %v702
        %744 = vmatmul.f32.gmra.mxu0 %v720
        %v745 = vpop.f32.mrf.mxu0
        %v746 = vadd.f32 %v716, %v745
        %747 = vdwg.mxu0
        %748 = vmatpush.msra.mxu0 0.0
        %749 = vmatpush.msra.mxu0 0.0
        %750 = vmatpush.msra.mxu0 0.0
        %751 = vmatpush.msra.mxu0 0.0
        %752 = vmatpush.msra.mxu0 0.0
        %753 = vmatpush.msra.mxu0 0.0
        %754 = vmatpush.msra.mxu0 0.0
        %755 = vmatpush.msra.mxu0 0.0
        %756 = vmatpush.msra.mxu0 0.0
        %757 = vmatpush.msra.mxu0 0.0
        %758 = vmatpush.msra.mxu0 0.0
        %759 = vmatpush.msra.mxu0 %v726
        %760 = vmatpush.msra.mxu0 %v709
        %761 = vmatpush.msra.mxu0 %v707
        %762 = vmatpush.msra.mxu0 %v705
        %763 = vmatpush.msra.mxu0 %v703
        %764 = vmatmul.f32.gmra.mxu0 %v720
        %v765 = vpop.f32.mrf.mxu0
        %v766 = vadd.f32 %v716, %v765
        %767 = vdwg.mxu0
        %v768 = vmax.f32 %v746, 0.0
        %v769 = vmax.f32 %v766, 0.0
        %770 = vst [vmem:[%s271 + $0x10] sm:$0xff] %v768
        %771 = vst [vmem:[%s271 + $0x18] sm:$0xff] %v769
        %vm772 = vcmask 273408
        %773 = vst.msk [vmem:[#allocation4] sm:$0xf] %vm772, 0.0
        %vm774 = vcmask 552208
        %775 = vst.msk [vmem:[#allocation4 + $0x8] sm:$0xf] %vm774, 0.0
        %776 = vst.sshfl [vmem:[#allocation1] sm:$0xff pattern:$0x75316420] %v399
        %777 = vst.sshfl [vmem:[#allocation1 + $0x8] sm:$0xff pattern:$0x75316420] %v400
        %s778 = scalar_lea.vmem [#allocation1], 1
        %v779 = vld [vmem:[%s778] ss:$2 sm:$0xff]
        %780 = vrot.lane.b32.xlu0 %v779, 34
        %v781 = vpop.permute.xlu0 %780
        %v782 = vrot.slane %v781, 4
        %v783 = vsel %vm674, %v782, %v781
        %vm786 = vcmask 1043728
        %vm787 = vmor %vm421, %vm786
        %788 = vst.msk [vmem:[#allocation4] sm:$0xff] %vm787, %v783
        %789 = vst.msk [vmem:[#allocation4 + $0x8] sm:$0xf] %vm772, %v782
        %v790 = vld [vmem:[#allocation4] sm:$0xff]
        %v791 = vadd.s32 %v303, 4294967294
        %v792 = vadd.s32 %v304, 4294967294
        %vm793 = vcmp.ge.s32.totalorder %v791, 0
        %vm794 = vcmp.ge.s32.totalorder %v792, 0
        %vm795 = vcmp.lt.s32.totalorder %v791, 16
        %vm796 = vcmp.lt.s32.totalorder %v792, 16
        %vm797 = vmand %vm793, %vm795
        %vm798 = vmand %vm794, %vm796
        %v799 = vsel %vm797, 1, 0
        %v800 = vsel %vm798, 1, 0
        %v801 = vcvt.s32.f32 %v799
        %v802 = vcvt.s32.f32 %v800
        %v805 = vrot.slane %v802, 4
        %v806 = vsel %vm340, %v801, %v805
        %v808 = vmul.f32 %v790, %v806
        %810 = vst [vmem:[#allocation1] ss:$2 sm:$0xff] %v808
        %v811 = vld.sshfl [vmem:[#allocation1] sm:$0xff pattern:$0x75316420]
        %v812 = vld.sshfl [vmem:[#allocation1 + $0x8] sm:$0xff pattern:$0x75316420]
        %815 = vst [vmem:[#allocation5] sm:$0xf] %v811
        %816 = vst [vmem:[#allocation5 + $0x8] sm:$0xf] %v812
        %v817 = vld [vmem:[#allocation4] sm:$0xff]
        %v818 = vld [vmem:[#allocation4 + $0x8] sm:$0xf]
        %819 = vrot.lane.b32.xlu0 %v441, 1
        %v820 = vpop.permute.xlu0 %819
        %v821 = vrot.slane %v820, 4
        %vm822 = vcmask 7168
        %v823 = vsel %vm822, %v821, %v820
        %v826 = vmul.f32 %v817, %v823
        %v827 = vmul.f32 %v818, %v821
        %s830 = scalar_lea.vmem [#allocation1], 1
        %831 = vst [vmem:[%s830] ss:$2 sm:$0xff] %v826
        %s832 = scalar_lea.vmem [#allocation1], 17
        %833 = vst [vmem:[%s832] ss:$2 sm:$0xff] %v827
        %v834 = vld.sshfl [vmem:[#allocation1] sm:$0xff pattern:$0x75316420]
        %v835 = vld.sshfl [vmem:[#allocation1 + $0x8] sm:$0xff pattern:$0x75316420]
        %v836 = vld.sshfl [vmem:[#allocation1 + $0x10] sm:$0xff pattern:$0x75316420]
        %837 = vrot.lane.b32.xlu0 %v834, 127
        %v838 = vpop.permute.xlu0 %837
        %839 = vrot.lane.b32.xlu0 %v835, 127
        %v840 = vpop.permute.xlu0 %839
        %841 = vrot.lane.b32.xlu0 %v836, 127
        %v842 = vpop.permute.xlu0 %841
        %v843 = vsel %vm469, %v838, %v840
        %v844 = vsel %vm469, %v840, %v842
        %847 = vst [vmem:[#allocation5] sm:$0xf0] %v843
        %848 = vst [vmem:[#allocation5 + $0x8] sm:$0xf0] %v844
        %v849 = vld [vmem:[#allocation4] sm:$0xff]
        %v850 = vld [vmem:[#allocation4 + $0x8] sm:$0xf]
        %853 = vst [vmem:[#allocation1] ss:$2 sm:$0xff] %v849
        %s854 = scalar_lea.vmem [#allocation1], 16
        %855 = vst [vmem:[%s854] ss:$2 sm:$0xff] %v850
        %v856 = vld.sshfl [vmem:[#allocation1] sm:$0xff pattern:$0x75316420]
        %v857 = vld.sshfl [vmem:[#allocation1 + $0x8] sm:$0xff pattern:$0x75316420]
        %v858 = vld.sshfl [vmem:[#allocation1 + $0x10] sm:$0xff pattern:$0x75316420]
        %859 = vrot.lane.b32.xlu0 %v856, 126
        %v860 = vpop.permute.xlu0 %859
        %861 = vrot.lane.b32.xlu0 %v857, 126
        %v862 = vpop.permute.xlu0 %861
        %863 = vrot.lane.b32.xlu0 %v858, 126
        %v864 = vpop.permute.xlu0 %863
        %v865 = vsel %vm517, %v860, %v862
        %v866 = vsel %vm517, %v862, %v864
        %869 = vst [vmem:[#allocation5 + $0x10] sm:$0xf] %v865
        %870 = vst [vmem:[#allocation5 + $0x18] sm:$0xf] %v866
        %v871 = vld [vmem:[#allocation4] sm:$0xff]
        %v872 = vld [vmem:[#allocation4 + $0x8] sm:$0xf]
        %873 = vrot.lane.b32.xlu0 %v493, 3
        %v874 = vpop.permute.xlu0 %873
        %v875 = vrot.slane %v874, 4
        %vm876 = vcmask 23552
        %v877 = vsel %vm876, %v875, %v874
        %v880 = vmul.f32 %v871, %v877
        %v881 = vmul.f32 %v872, %v875
        %s884 = scalar_lea.vmem [#allocation1], 1
        %885 = vst [vmem:[%s884] ss:$2 sm:$0xff] %v880
        %s886 = scalar_lea.vmem [#allocation1], 17
        %887 = vst [vmem:[%s886] ss:$2 sm:$0xff] %v881
        %v888 = vld.sshfl [vmem:[#allocation1] sm:$0xff pattern:$0x75316420]
        %v889 = vld.sshfl [vmem:[#allocation1 + $0x8] sm:$0xff pattern:$0x75316420]
        %v890 = vld.sshfl [vmem:[#allocation1 + $0x10] sm:$0xff pattern:$0x75316420]
        %891 = vrot.lane.b32.xlu0 %v888, 125
        %v892 = vpop.permute.xlu0 %891
        %893 = vrot.lane.b32.xlu0 %v889, 125
        %v894 = vpop.permute.xlu0 %893
        %895 = vrot.lane.b32.xlu0 %v890, 125
        %v896 = vpop.permute.xlu0 %895
        %vm897 = vcmask 1022976
        %v898 = vsel %vm897, %v892, %v894
        %v899 = vsel %vm897, %v894, %v896
        %902 = vst [vmem:[#allocation5 + $0x10] sm:$0xf0] %v898
        %903 = vst [vmem:[#allocation5 + $0x18] sm:$0xf0] %v899
        %v904 = vld [vmem:[#allocation4] sm:$0xff]
        %v905 = vld [vmem:[#allocation4 + $0x8] sm:$0xf]
        %v906 = vadd.s32 %v303, 2
        %v907 = vadd.s32 %v304, 2
        %vm908 = vcmp.ge.s32.totalorder %v906, 0
        %vm909 = vcmp.ge.s32.totalorder %v907, 0
        %vm910 = vcmp.lt.s32.totalorder %v906, 16
        %vm911 = vcmp.lt.s32.totalorder %v907, 16
        %vm912 = vmand %vm908, %vm910
        %vm913 = vmand %vm909, %vm911
        %v914 = vsel %vm912, 1, 0
        %v915 = vsel %vm913, 1, 0
        %v916 = vcvt.s32.f32 %v914
        %v917 = vcvt.s32.f32 %v915
        %v920 = vrot.slane %v917, 4
        %v921 = vsel %vm340, %v916, %v920
        %922 = vrot.lane.b32.xlu0 %v921, 4
        %v923 = vpop.permute.xlu0 %922
        %v924 = vrot.slane %v923, 4
        %v925 = vsel %vm330, %v924, %v923
        %v928 = vmul.f32 %v904, %v925
        %v929 = vmul.f32 %v905, %v924
        %932 = vst [vmem:[#allocation1] ss:$2 sm:$0xff] %v928
        %s933 = scalar_lea.vmem [#allocation1], 16
        %934 = vst [vmem:[%s933] ss:$2 sm:$0xff] %v929
        %v935 = vld.sshfl [vmem:[#allocation1] sm:$0xff pattern:$0x75316420]
        %v936 = vld.sshfl [vmem:[#allocation1 + $0x8] sm:$0xff pattern:$0x75316420]
        %v937 = vld.sshfl [vmem:[#allocation1 + $0x10] sm:$0xff pattern:$0x75316420]
        %938 = vrot.lane.b32.xlu0 %v935, 124
        %v939 = vpop.permute.xlu0 %938
        %940 = vrot.lane.b32.xlu0 %v936, 124
        %v941 = vpop.permute.xlu0 %940
        %942 = vrot.lane.b32.xlu0 %v937, 124
        %v943 = vpop.permute.xlu0 %942
        %vm944 = vcmask 1014784
        %v945 = vsel %vm944, %v939, %v941
        %v946 = vsel %vm944, %v941, %v943
        %949 = vst [vmem:[#allocation5 + $0x20] sm:$0xf] %v945
        %950 = vst [vmem:[#allocation5 + $0x28] sm:$0xf] %v946
        %v951 = vld [vmem:[#allocation4] sm:$0xff]
        %v952 = vld [vmem:[#allocation4 + $0x8] sm:$0xf]
        %953 = vrot.lane.b32.xlu0 %v806, 16
        %v954 = vpop.permute.xlu0 %953
        %v955 = vrot.slane %v954, 4
        %v956 = vsel %vm529, %v955, %v954
        %v959 = vmul.f32 %v951, %v956
        %v960 = vmul.f32 %v952, %v955
        %s963 = scalar_lea.vmem [#allocation1], 1
        %964 = vst [vmem:[%s963] ss:$2 sm:$0xff] %v959
        %s965 = scalar_lea.vmem [#allocation1], 17
        %966 = vst [vmem:[%s965] ss:$2 sm:$0xff] %v960
        %v967 = vld.sshfl [vmem:[#allocation1] sm:$0xff pattern:$0x75316420]
        %v968 = vld.sshfl [vmem:[#allocation1 + $0x8] sm:$0xff pattern:$0x75316420]
        %v969 = vld.sshfl [vmem:[#allocation1 + $0x10] sm:$0xff pattern:$0x75316420]
        %970 = vrot.lane.b32.xlu0 %v967, 112
        %v971 = vpop.permute.xlu0 %970
        %972 = vrot.lane.b32.xlu0 %v968, 112
        %v973 = vpop.permute.xlu0 %972
        %974 = vrot.lane.b32.xlu0 %v969, 112
        %v975 = vpop.permute.xlu0 %974
        %v976 = vsel %vm550, %v971, %v973
        %v977 = vsel %vm550, %v973, %v975
        %980 = vst [vmem:[#allocation5 + $0x20] sm:$0xf0] %v976
        %981 = vst [vmem:[#allocation5 + $0x28] sm:$0xf0] %v977
        %v982 = vld [vmem:[#allocation4] sm:$0xff]
        %v983 = vld [vmem:[#allocation4 + $0x8] sm:$0xf]
        %984 = vrot.lane.b32.xlu0 %v441, 17
        %v985 = vpop.permute.xlu0 %984
        %v986 = vrot.slane %v985, 4
        %v987 = vsel %vm416, %v986, %v985
        %v990 = vmul.f32 %v982, %v987
        %v991 = vmul.f32 %v983, %v986
        %994 = vst [vmem:[#allocation1] ss:$2 sm:$0xff] %v990
        %s995 = scalar_lea.vmem [#allocation1], 16
        %996 = vst [vmem:[%s995] ss:$2 sm:$0xff] %v991
        %v997 = vld.sshfl [vmem:[#allocation1] sm:$0xff pattern:$0x75316420]
        %v998 = vld.sshfl [vmem:[#allocation1 + $0x8] sm:$0xff pattern:$0x75316420]
        %v999 = vld.sshfl [vmem:[#allocation1 + $0x10] sm:$0xff pattern:$0x75316420]
        %1000 = vrot.lane.b32.xlu0 %v997, 111
        %v1001 = vpop.permute.xlu0 %1000
        %1002 = vrot.lane.b32.xlu0 %v998, 111
        %v1003 = vpop.permute.xlu0 %1002
        %1004 = vrot.lane.b32.xlu0 %v999, 111
        %v1005 = vpop.permute.xlu0 %1004
        %v1006 = vsel %vm573, %v1001, %v1003
        %v1007 = vsel %vm573, %v1003, %v1005
        %1010 = vst [vmem:[#allocation5 + $0x30] sm:$0xf] %v1006
        %1011 = vst [vmem:[#allocation5 + $0x38] sm:$0xf] %v1007
        %v1012 = vld [vmem:[#allocation4] sm:$0xff]
        %v1013 = vld [vmem:[#allocation4 + $0x8] sm:$0xf]
        %s1016 = scalar_lea.vmem [#allocation1], 1
        %1017 = vst [vmem:[%s1016] ss:$2 sm:$0xff] %v1012
        %s1018 = scalar_lea.vmem [#allocation1], 17
        %1019 = vst [vmem:[%s1018] ss:$2 sm:$0xff] %v1013
        %v1020 = vld.sshfl [vmem:[#allocation1] sm:$0xff pattern:$0x75316420]
        %v1021 = vld.sshfl [vmem:[#allocation1 + $0x8] sm:$0xff pattern:$0x75316420]
        %v1022 = vld.sshfl [vmem:[#allocation1 + $0x10] sm:$0xff pattern:$0x75316420]
        %1023 = vrot.lane.b32.xlu0 %v1020, 110
        %v1024 = vpop.permute.xlu0 %1023
        %1025 = vrot.lane.b32.xlu0 %v1021, 110
        %v1026 = vpop.permute.xlu0 %1025
        %1027 = vrot.lane.b32.xlu0 %v1022, 110
        %v1028 = vpop.permute.xlu0 %1027
        %v1029 = vsel %vm606, %v1024, %v1026
        %v1030 = vsel %vm606, %v1026, %v1028
        %1033 = vst [vmem:[#allocation5 + $0x30] sm:$0xf0] %v1029
        %1034 = vst [vmem:[#allocation5 + $0x38] sm:$0xf0] %v1030
        %v1035 = vld [vmem:[#allocation4] sm:$0xff]
        %v1036 = vld [vmem:[#allocation4 + $0x8] sm:$0xf]
        %1037 = vrot.lane.b32.xlu0 %v493, 19
        %v1038 = vpop.permute.xlu0 %1037
        %v1039 = vrot.slane %v1038, 4
        %vm1040 = vcmask 154624
        %v1041 = vsel %vm1040, %v1039, %v1038
        %v1044 = vmul.f32 %v1035, %v1041
        %v1045 = vmul.f32 %v1036, %v1039
        %1048 = vst [vmem:[#allocation1] ss:$2 sm:$0xff] %v1044
        %s1049 = scalar_lea.vmem [#allocation1], 16
        %1050 = vst [vmem:[%s1049] ss:$2 sm:$0xff] %v1045
        %v1051 = vld.sshfl [vmem:[#allocation1] sm:$0xff pattern:$0x75316420]
        %v1052 = vld.sshfl [vmem:[#allocation1 + $0x8] sm:$0xff pattern:$0x75316420]
        %v1053 = vld.sshfl [vmem:[#allocation1 + $0x10] sm:$0xff pattern:$0x75316420]
        %1054 = vrot.lane.b32.xlu0 %v1051, 109
        %v1055 = vpop.permute.xlu0 %1054
        %1056 = vrot.lane.b32.xlu0 %v1052, 109
        %v1057 = vpop.permute.xlu0 %1056
        %1058 = vrot.lane.b32.xlu0 %v1053, 109
        %v1059 = vpop.permute.xlu0 %1058
        %vm1060 = vcmask 891904
        %v1061 = vsel %vm1060, %v1055, %v1057
        %v1062 = vsel %vm1060, %v1057, %v1059
        %1065 = vst [vmem:[#allocation5 + $0x40] sm:$0xf] %v1061
        %1066 = vst [vmem:[#allocation5 + $0x48] sm:$0xf] %v1062
        %v1067 = vld [vmem:[#allocation4] sm:$0xff]
        %v1068 = vld [vmem:[#allocation4 + $0x8] sm:$0xf]
        %1069 = vrot.lane.b32.xlu0 %v921, 20
        %v1070 = vpop.permute.xlu0 %1069
        %v1071 = vrot.slane %v1070, 4
        %vm1072 = vcmask 162816
        %v1073 = vsel %vm1072, %v1071, %v1070
        %v1076 = vmul.f32 %v1067, %v1073
        %v1077 = vmul.f32 %v1068, %v1071
        %s1080 = scalar_lea.vmem [#allocation1], 1
        %1081 = vst [vmem:[%s1080] ss:$2 sm:$0xff] %v1076
        %s1082 = scalar_lea.vmem [#allocation1], 17
        %1083 = vst [vmem:[%s1082] ss:$2 sm:$0xff] %v1077
        %v1084 = vld.sshfl [vmem:[#allocation1] sm:$0xff pattern:$0x75316420]
        %v1085 = vld.sshfl [vmem:[#allocation1 + $0x8] sm:$0xff pattern:$0x75316420]
        %v1086 = vld.sshfl [vmem:[#allocation1 + $0x10] sm:$0xff pattern:$0x75316420]
        %1087 = vrot.lane.b32.xlu0 %v1084, 108
        %v1088 = vpop.permute.xlu0 %1087
        %1089 = vrot.lane.b32.xlu0 %v1085, 108
        %v1090 = vpop.permute.xlu0 %1089
        %1091 = vrot.lane.b32.xlu0 %v1086, 108
        %v1092 = vpop.permute.xlu0 %1091
        %vm1093 = vcmask 883712
        %v1094 = vsel %vm1093, %v1088, %v1090
        %v1095 = vsel %vm1093, %v1090, %v1092
        %1098 = vst [vmem:[#allocation5 + $0x40] sm:$0xf0] %v1094
        %1099 = vst [vmem:[#allocation5 + $0x48] sm:$0xf0] %v1095
        %v1100 = vld [vmem:[#allocation4] sm:$0xff]
        %v1101 = vld [vmem:[#allocation4 + $0x8] sm:$0xf]
        %1102 = vrot.lane.b32.xlu0 %v806, 32
        %v1103 = vpop.permute.xlu0 %1102
        %v1104 = vrot.slane %v1103, 4
        %v1105 = vsel %vm618, %v1104, %v1103
        %v1108 = vmul.f32 %v1100, %v1105
        %v1109 = vmul.f32 %v1101, %v1104
        %1112 = vst [vmem:[#allocation1] ss:$2 sm:$0xff] %v1108
        %s1113 = scalar_lea.vmem [#allocation1], 16
        %1114 = vst [vmem:[%s1113] ss:$2 sm:$0xff] %v1109
        %v1115 = vld.sshfl [vmem:[#allocation1] sm:$0xff pattern:$0x75316420]
        %v1116 = vld.sshfl [vmem:[#allocation1 + $0x8] sm:$0xff pattern:$0x75316420]
        %v1117 = vld.sshfl [vmem:[#allocation1 + $0x10] sm:$0xff pattern:$0x75316420]
        %1118 = vrot.lane.b32.xlu0 %v1115, 96
        %v1119 = vpop.permute.xlu0 %1118
        %1120 = vrot.lane.b32.xlu0 %v1116, 96
        %v1121 = vpop.permute.xlu0 %1120
        %1122 = vrot.lane.b32.xlu0 %v1117, 96
        %v1123 = vpop.permute.xlu0 %1122
        %v1124 = vsel %vm638, %v1119, %v1121
        %v1125 = vsel %vm638, %v1121, %v1123
        %1128 = vst [vmem:[#allocation5 + $0x50] sm:$0xf] %v1124
        %1129 = vst [vmem:[#allocation5 + $0x58] sm:$0xf] %v1125
        %v1130 = vld [vmem:[#allocation4] sm:$0xff]
        %v1131 = vld [vmem:[#allocation4 + $0x8] sm:$0xf]
        %1132 = vrot.lane.b32.xlu0 %v441, 33
        %v1133 = vpop.permute.xlu0 %1132
        %v1134 = vrot.slane %v1133, 4
        %vm1135 = vcmask 269312
        %v1136 = vsel %vm1135, %v1134, %v1133
        %v1139 = vmul.f32 %v1130, %v1136
        %v1140 = vmul.f32 %v1131, %v1134
        %s1143 = scalar_lea.vmem [#allocation1], 1
        %1144 = vst [vmem:[%s1143] ss:$2 sm:$0xff] %v1139
        %s1145 = scalar_lea.vmem [#allocation1], 17
        %1146 = vst [vmem:[%s1145] ss:$2 sm:$0xff] %v1140
        %v1147 = vld.sshfl [vmem:[#allocation1] sm:$0xff pattern:$0x75316420]
        %v1148 = vld.sshfl [vmem:[#allocation1 + $0x8] sm:$0xff pattern:$0x75316420]
        %v1149 = vld.sshfl [vmem:[#allocation1 + $0x10] sm:$0xff pattern:$0x75316420]
        %1150 = vrot.lane.b32.xlu0 %v1147, 95
        %v1151 = vpop.permute.xlu0 %1150
        %1152 = vrot.lane.b32.xlu0 %v1148, 95
        %v1153 = vpop.permute.xlu0 %1152
        %1154 = vrot.lane.b32.xlu0 %v1149, 95
        %v1155 = vpop.permute.xlu0 %1154
        %v1156 = vsel %vm662, %v1151, %v1153
        %v1157 = vsel %vm662, %v1153, %v1155
        %1160 = vst [vmem:[#allocation5 + $0x50] sm:$0xf0] %v1156
        %1161 = vst [vmem:[#allocation5 + $0x58] sm:$0xf0] %v1157
        %v1162 = vld [vmem:[#allocation4] sm:$0xff]
        %v1163 = vld [vmem:[#allocation4 + $0x8] sm:$0xf]
        %1166 = vst [vmem:[#allocation1] ss:$2 sm:$0xff] %v1162
        %s1167 = scalar_lea.vmem [#allocation1], 16
        %1168 = vst [vmem:[%s1167] ss:$2 sm:$0xff] %v1163
        %v1169 = vld.sshfl [vmem:[#allocation1] sm:$0xff pattern:$0x75316420]
        %v1170 = vld.sshfl [vmem:[#allocation1 + $0x8] sm:$0xff pattern:$0x75316420]
        %v1171 = vld.sshfl [vmem:[#allocation1 + $0x10] sm:$0xff pattern:$0x75316420]
        %1172 = vrot.lane.b32.xlu0 %v1169, 94
        %v1173 = vpop.permute.xlu0 %1172
        %1174 = vrot.lane.b32.xlu0 %v1170, 94
        %v1175 = vpop.permute.xlu0 %1174
        %1176 = vrot.lane.b32.xlu0 %v1171, 94
        %v1177 = vpop.permute.xlu0 %1176
        %v1178 = vsel %vm694, %v1173, %v1175
        %v1179 = vsel %vm694, %v1175, %v1177
        %1182 = vst [vmem:[#allocation5 + $0x60] sm:$0xf] %v1178
        %1183 = vst [vmem:[#allocation5 + $0x68] sm:$0xf] %v1179
        %v1184 = vld [vmem:[#allocation4] sm:$0xff]
        %v1185 = vld [vmem:[#allocation4 + $0x8] sm:$0xf]
        %1186 = vrot.lane.b32.xlu0 %v493, 35
        %v1187 = vpop.permute.xlu0 %1186
        %v1188 = vrot.slane %v1187, 4
        %vm1189 = vcmask 285696
        %v1190 = vsel %vm1189, %v1188, %v1187
        %v1193 = vmul.f32 %v1184, %v1190
        %v1194 = vmul.f32 %v1185, %v1188
        %s1197 = scalar_lea.vmem [#allocation1], 1
        %1198 = vst [vmem:[%s1197] ss:$2 sm:$0xff] %v1193
        %s1199 = scalar_lea.vmem [#allocation1], 17
        %1200 = vst [vmem:[%s1199] ss:$2 sm:$0xff] %v1194
        %v1201 = vld.sshfl [vmem:[#allocation1] sm:$0xff pattern:$0x75316420]
        %v1202 = vld.sshfl [vmem:[#allocation1 + $0x8] sm:$0xff pattern:$0x75316420]
        %v1203 = vld.sshfl [vmem:[#allocation1 + $0x10] sm:$0xff pattern:$0x75316420]
        %1204 = vrot.lane.b32.xlu0 %v1201, 93
        %v1205 = vpop.permute.xlu0 %1204
        %1206 = vrot.lane.b32.xlu0 %v1202, 93
        %v1207 = vpop.permute.xlu0 %1206
        %1208 = vrot.lane.b32.xlu0 %v1203, 93
        %v1209 = vpop.permute.xlu0 %1208
        %vm1210 = vcmask 760832
        %v1211 = vsel %vm1210, %v1205, %v1207
        %v1212 = vsel %vm1210, %v1207, %v1209
        %1215 = vst [vmem:[#allocation5 + $0x60] sm:$0xf0] %v1211
        %1216 = vst [vmem:[#allocation5 + $0x68] sm:$0xf0] %v1212
        %v1217 = vld [vmem:[#allocation4] sm:$0xff]
        %v1218 = vld [vmem:[#allocation4 + $0x8] sm:$0xf]
        %1219 = vrot.lane.b32.xlu0 %v921, 36
        %v1220 = vpop.permute.xlu0 %1219
        %v1221 = vrot.slane %v1220, 4
        %v1222 = vsel %vm718, %v1221, %v1220
        %v1225 = vmul.f32 %v1217, %v1222
        %v1226 = vmul.f32 %v1218, %v1221
        %1229 = vst [vmem:[#allocation1] ss:$2 sm:$0xff] %v1225
        %s1230 = scalar_lea.vmem [#allocation1], 16
        %1231 = vst [vmem:[%s1230] ss:$2 sm:$0xff] %v1226
        %v1232 = vld.sshfl [vmem:[#allocation1] sm:$0xff pattern:$0x75316420]
        %v1233 = vld.sshfl [vmem:[#allocation1 + $0x8] sm:$0xff pattern:$0x75316420]
        %v1234 = vld.sshfl [vmem:[#allocation1 + $0x10] sm:$0xff pattern:$0x75316420]
        %1235 = vrot.lane.b32.xlu0 %v1232, 92
        %v1236 = vpop.permute.xlu0 %1235
        %1237 = vrot.lane.b32.xlu0 %v1233, 92
        %v1238 = vpop.permute.xlu0 %1237
        %1239 = vrot.lane.b32.xlu0 %v1234, 92
        %v1240 = vpop.permute.xlu0 %1239
        %vm1241 = vcmask 752640
        %v1242 = vsel %vm1241, %v1236, %v1238
        %v1243 = vsel %vm1241, %v1238, %v1240
        %1246 = vst [vmem:[#allocation5 + $0x70] sm:$0xf] %v1242
        %1247 = vst [vmem:[#allocation5 + $0x78] sm:$0xf] %v1243
        %v1248 = vld [vmem:[#allocation4] sm:$0xff]
        %v1249 = vld [vmem:[#allocation4 + $0x8] sm:$0xf]
        %1250 = vrot.lane.b32.xlu0 %v806, 48
        %v1251 = vpop.permute.xlu0 %1250
        %v1252 = vrot.slane %v1251, 4
        %vm1253 = vcmask 392192
        %v1254 = vsel %vm1253, %v1252, %v1251
        %v1257 = vmul.f32 %v1248, %v1254
        %v1258 = vmul.f32 %v1249, %v1252
        %s1261 = scalar_lea.vmem [#allocation1], 1
        %1262 = vst [vmem:[%s1261] ss:$2 sm:$0xff] %v1257
        %s1263 = scalar_lea.vmem [#allocation1], 17
        %1264 = vst [vmem:[%s1263] ss:$2 sm:$0xff] %v1258
        %v1265 = vld.sshfl [vmem:[#allocation1] sm:$0xff pattern:$0x75316420]
        %v1266 = vld.sshfl [vmem:[#allocation1 + $0x8] sm:$0xff pattern:$0x75316420]
        %v1267 = vld.sshfl [vmem:[#allocation1 + $0x10] sm:$0xff pattern:$0x75316420]
        %1268 = vrot.lane.b32.xlu0 %v1265, 80
        %v1269 = vpop.permute.xlu0 %1268
        %1270 = vrot.lane.b32.xlu0 %v1266, 80
        %v1271 = vpop.permute.xlu0 %1270
        %1272 = vrot.lane.b32.xlu0 %v1267, 80
        %v1273 = vpop.permute.xlu0 %1272
        %vm1274 = vcmask 654336
        %v1275 = vsel %vm1274, %v1269, %v1271
        %v1276 = vsel %vm1274, %v1271, %v1273
        %1279 = vst [vmem:[#allocation5 + $0x70] sm:$0xf0] %v1275
        %1280 = vst [vmem:[#allocation5 + $0x78] sm:$0xf0] %v1276
        %v1281 = vld [vmem:[#allocation4] sm:$0xff]
        %v1282 = vld [vmem:[#allocation4 + $0x8] sm:$0xf]
        %1283 = vrot.lane.b32.xlu0 %v441, 49
        %v1284 = vpop.permute.xlu0 %1283
        %v1285 = vrot.slane %v1284, 4
        %vm1286 = vcmask 400384
        %v1287 = vsel %vm1286, %v1285, %v1284
        %v1290 = vmul.f32 %v1281, %v1287
        %v1291 = vmul.f32 %v1282, %v1285
        %1294 = vst [vmem:[#allocation1] ss:$2 sm:$0xff] %v1290
        %s1295 = scalar_lea.vmem [#allocation1], 16
        %1296 = vst [vmem:[%s1295] ss:$2 sm:$0xff] %v1291
        %v1297 = vld.sshfl [vmem:[#allocation1] sm:$0xff pattern:$0x75316420]
        %v1298 = vld.sshfl [vmem:[#allocation1 + $0x8] sm:$0xff pattern:$0x75316420]
        %v1299 = vld.sshfl [vmem:[#allocation1 + $0x10] sm:$0xff pattern:$0x75316420]
        %1300 = vrot.lane.b32.xlu0 %v1297, 79
        %v1301 = vpop.permute.xlu0 %1300
        %1302 = vrot.lane.b32.xlu0 %v1298, 79
        %v1303 = vpop.permute.xlu0 %1302
        %1304 = vrot.lane.b32.xlu0 %v1299, 79
        %v1305 = vpop.permute.xlu0 %1304
        %vm1306 = vcmask 646144
        %v1307 = vsel %vm1306, %v1301, %v1303
        %v1308 = vsel %vm1306, %v1303, %v1305
        %1311 = vst [vmem:[#allocation5 + $0x80] sm:$0xf] %v1307
        %1312 = vst [vmem:[#allocation5 + $0x88] sm:$0xf] %v1308
        %v1313 = vld [vmem:[#allocation4] sm:$0xff]
        %v1314 = vld [vmem:[#allocation4 + $0x8] sm:$0xf]
        %s1317 = scalar_lea.vmem [#allocation1], 1
        %1318 = vst [vmem:[%s1317] ss:$2 sm:$0xff] %v1313
        %s1319 = scalar_lea.vmem [#allocation1], 17
        %1320 = vst [vmem:[%s1319] ss:$2 sm:$0xff] %v1314
        %v1321 = vld.sshfl [vmem:[#allocation1] sm:$0xff pattern:$0x75316420]
        %v1322 = vld.sshfl [vmem:[#allocation1 + $0x8] sm:$0xff pattern:$0x75316420]
        %v1323 = vld.sshfl [vmem:[#allocation1 + $0x10] sm:$0xff pattern:$0x75316420]
        %1324 = vrot.lane.b32.xlu0 %v1321, 78
        %v1325 = vpop.permute.xlu0 %1324
        %1326 = vrot.lane.b32.xlu0 %v1322, 78
        %v1327 = vpop.permute.xlu0 %1326
        %1328 = vrot.lane.b32.xlu0 %v1323, 78
        %v1329 = vpop.permute.xlu0 %1328
        %vm1330 = vcmask 637952
        %v1331 = vsel %vm1330, %v1325, %v1327
        %v1332 = vsel %vm1330, %v1327, %v1329
        %1335 = vst [vmem:[#allocation5 + $0x80] sm:$0xf0] %v1331
        %1336 = vst [vmem:[#allocation5 + $0x88] sm:$0xf0] %v1332
        %v1337 = vld [vmem:[#allocation4] sm:$0xff]
        %v1338 = vld [vmem:[#allocation4 + $0x8] sm:$0xf]
        %1339 = vrot.lane.b32.xlu0 %v493, 51
        %v1340 = vpop.permute.xlu0 %1339
        %v1341 = vrot.slane %v1340, 4
        %vm1342 = vcmask 416768
        %v1343 = vsel %vm1342, %v1341, %v1340
        %v1346 = vmul.f32 %v1337, %v1343
        %v1347 = vmul.f32 %v1338, %v1341
        %1350 = vst [vmem:[#allocation1] ss:$2 sm:$0xff] %v1346
        %s1351 = scalar_lea.vmem [#allocation1], 16
        %1352 = vst [vmem:[%s1351] ss:$2 sm:$0xff] %v1347
        %v1353 = vld.sshfl [vmem:[#allocation1] sm:$0xff pattern:$0x75316420]
        %v1354 = vld.sshfl [vmem:[#allocation1 + $0x8] sm:$0xff pattern:$0x75316420]
        %v1355 = vld.sshfl [vmem:[#allocation1 + $0x10] sm:$0xff pattern:$0x75316420]
        %1356 = vrot.lane.b32.xlu0 %v1353, 77
        %v1357 = vpop.permute.xlu0 %1356
        %1358 = vrot.lane.b32.xlu0 %v1354, 77
        %v1359 = vpop.permute.xlu0 %1358
        %1360 = vrot.lane.b32.xlu0 %v1355, 77
        %v1361 = vpop.permute.xlu0 %1360
        %vm1362 = vcmask 629760
        %v1363 = vsel %vm1362, %v1357, %v1359
        %v1364 = vsel %vm1362, %v1359, %v1361
        %1367 = vst [vmem:[#allocation5 + $0x90] sm:$0xf] %v1363
        %1368 = vst [vmem:[#allocation5 + $0x98] sm:$0xf] %v1364
        %v1369 = vld [vmem:[#allocation4] sm:$0xff]
        %v1370 = vld [vmem:[#allocation4 + $0x8] sm:$0xf]
        %1371 = vrot.lane.b32.xlu0 %v921, 52
        %v1372 = vpop.permute.xlu0 %1371
        %v1373 = vrot.slane %v1372, 4
        %vm1374 = vcmask 424960
        %v1375 = vsel %vm1374, %v1373, %v1372
        %v1378 = vmul.f32 %v1369, %v1375
        %v1379 = vmul.f32 %v1370, %v1373
        %s1382 = scalar_lea.vmem [#allocation1], 1
        %1383 = vst [vmem:[%s1382] ss:$2 sm:$0xff] %v1378
        %s1384 = scalar_lea.vmem [#allocation1], 17
        %1385 = vst [vmem:[%s1384] ss:$2 sm:$0xff] %v1379
        %v1386 = vld.sshfl [vmem:[#allocation1] sm:$0xff pattern:$0x75316420]
        %v1387 = vld.sshfl [vmem:[#allocation1 + $0x8] sm:$0xff pattern:$0x75316420]
        %v1388 = vld.sshfl [vmem:[#allocation1 + $0x10] sm:$0xff pattern:$0x75316420]
        %1389 = vrot.lane.b32.xlu0 %v1386, 76
        %v1390 = vpop.permute.xlu0 %1389
        %1391 = vrot.lane.b32.xlu0 %v1387, 76
        %v1392 = vpop.permute.xlu0 %1391
        %1393 = vrot.lane.b32.xlu0 %v1388, 76
        %v1394 = vpop.permute.xlu0 %1393
        %vm1395 = vcmask 621568
        %v1396 = vsel %vm1395, %v1390, %v1392
        %v1397 = vsel %vm1395, %v1392, %v1394
        %1400 = vst [vmem:[#allocation5 + $0x90] sm:$0xf0] %v1396
        %1401 = vst [vmem:[#allocation5 + $0x98] sm:$0xf0] %v1397
        %v1402 = vld [vmem:[#allocation4] sm:$0xff]
        %v1403 = vld [vmem:[#allocation4 + $0x8] sm:$0xf]
        %1404 = vrot.lane.b32.xlu0 %v806, 64
        %v1405 = vpop.permute.xlu0 %1404
        %v1406 = vrot.slane %v1405, 4
        %vm1407 = vcmask 523264
        %v1408 = vsel %vm1407, %v1406, %v1405
        %v1411 = vmul.f32 %v1402, %v1408
        %v1412 = vmul.f32 %v1403, %v1406
        %1415 = vst [vmem:[#allocation1] ss:$2 sm:$0xff] %v1411
        %s1416 = scalar_lea.vmem [#allocation1], 16
        %1417 = vst [vmem:[%s1416] ss:$2 sm:$0xff] %v1412
        %v1418 = vld.sshfl [vmem:[#allocation1] sm:$0xff pattern:$0x75316420]
        %v1419 = vld.sshfl [vmem:[#allocation1 + $0x8] sm:$0xff pattern:$0x75316420]
        %v1420 = vld.sshfl [vmem:[#allocation1 + $0x10] sm:$0xff pattern:$0x75316420]
        %1421 = vrot.lane.b32.xlu0 %v1418, 64
        %v1422 = vpop.permute.xlu0 %1421
        %1423 = vrot.lane.b32.xlu0 %v1419, 64
        %v1424 = vpop.permute.xlu0 %1423
        %1425 = vrot.lane.b32.xlu0 %v1420, 64
        %v1426 = vpop.permute.xlu0 %1425
        %v1427 = vsel %vm1407, %v1422, %v1424
        %v1428 = vsel %vm1407, %v1424, %v1426
        %1431 = vst [vmem:[#allocation5 + $0xa0] sm:$0xf] %v1427
        %1432 = vst [vmem:[#allocation5 + $0xa8] sm:$0xf] %v1428
        %v1433 = vld [vmem:[#allocation4] sm:$0xff]
        %v1434 = vld [vmem:[#allocation4 + $0x8] sm:$0xf]
        %1435 = vrot.lane.b32.xlu0 %v441, 65
        %v1436 = vpop.permute.xlu0 %1435
        %v1437 = vrot.slane %v1436, 4
        %vm1438 = vcmask 531456
        %v1439 = vsel %vm1438, %v1437, %v1436
        %v1442 = vmul.f32 %v1433, %v1439
        %v1443 = vmul.f32 %v1434, %v1437
        %s1446 = scalar_lea.vmem [#allocation1], 1
        %1447 = vst [vmem:[%s1446] ss:$2 sm:$0xff] %v1442
        %s1448 = scalar_lea.vmem [#allocation1], 17
        %1449 = vst [vmem:[%s1448] ss:$2 sm:$0xff] %v1443
        %v1450 = vld.sshfl [vmem:[#allocation1] sm:$0xff pattern:$0x75316420]
        %v1451 = vld.sshfl [vmem:[#allocation1 + $0x8] sm:$0xff pattern:$0x75316420]
        %v1452 = vld.sshfl [vmem:[#allocation1 + $0x10] sm:$0xff pattern:$0x75316420]
        %1453 = vrot.lane.b32.xlu0 %v1450, 63
        %v1454 = vpop.permute.xlu0 %1453
        %1455 = vrot.lane.b32.xlu0 %v1451, 63
        %v1456 = vpop.permute.xlu0 %1455
        %1457 = vrot.lane.b32.xlu0 %v1452, 63
        %v1458 = vpop.permute.xlu0 %1457
        %vm1459 = vcmask 515072
        %v1460 = vsel %vm1459, %v1454, %v1456
        %v1461 = vsel %vm1459, %v1456, %v1458
        %1464 = vst [vmem:[#allocation5 + $0xa0] sm:$0xf0] %v1460
        %1465 = vst [vmem:[#allocation5 + $0xa8] sm:$0xf0] %v1461
        %v1466 = vld [vmem:[#allocation4] sm:$0xff]
        %v1467 = vld [vmem:[#allocation4 + $0x8] sm:$0xf]
        %1470 = vst [vmem:[#allocation1] ss:$2 sm:$0xff] %v1466
        %s1471 = scalar_lea.vmem [#allocation1], 16
        %1472 = vst [vmem:[%s1471] ss:$2 sm:$0xff] %v1467
        %v1473 = vld.sshfl [vmem:[#allocation1] sm:$0xff pattern:$0x75316420]
        %v1474 = vld.sshfl [vmem:[#allocation1 + $0x8] sm:$0xff pattern:$0x75316420]
        %v1475 = vld.sshfl [vmem:[#allocation1 + $0x10] sm:$0xff pattern:$0x75316420]
        %1476 = vrot.lane.b32.xlu0 %v1473, 62
        %v1477 = vpop.permute.xlu0 %1476
        %1478 = vrot.lane.b32.xlu0 %v1474, 62
        %v1479 = vpop.permute.xlu0 %1478
        %1480 = vrot.lane.b32.xlu0 %v1475, 62
        %v1481 = vpop.permute.xlu0 %1480
        %vm1482 = vcmask 506880
        %v1483 = vsel %vm1482, %v1477, %v1479
        %v1484 = vsel %vm1482, %v1479, %v1481
        %1487 = vst [vmem:[#allocation5 + $0xb0] sm:$0xf] %v1483
        %1488 = vst [vmem:[#allocation5 + $0xb8] sm:$0xf] %v1484
        %v1489 = vld [vmem:[#allocation4] sm:$0xff]
        %v1490 = vld [vmem:[#allocation4 + $0x8] sm:$0xf]
        %1491 = vrot.lane.b32.xlu0 %v493, 67
        %v1492 = vpop.permute.xlu0 %1491
        %v1493 = vrot.slane %v1492, 4
        %vm1494 = vcmask 547840
        %v1495 = vsel %vm1494, %v1493, %v1492
        %v1498 = vmul.f32 %v1489, %v1495
        %v1499 = vmul.f32 %v1490, %v1493
        %s1502 = scalar_lea.vmem [#allocation1], 1
        %1503 = vst [vmem:[%s1502] ss:$2 sm:$0xff] %v1498
        %s1504 = scalar_lea.vmem [#allocation1], 17
        %1505 = vst [vmem:[%s1504] ss:$2 sm:$0xff] %v1499
        %v1506 = vld.sshfl [vmem:[#allocation1] sm:$0xff pattern:$0x75316420]
        %v1507 = vld.sshfl [vmem:[#allocation1 + $0x8] sm:$0xff pattern:$0x75316420]
        %v1508 = vld.sshfl [vmem:[#allocation1 + $0x10] sm:$0xff pattern:$0x75316420]
        %1509 = vrot.lane.b32.xlu0 %v1506, 61
        %v1510 = vpop.permute.xlu0 %1509
        %1511 = vrot.lane.b32.xlu0 %v1507, 61
        %v1512 = vpop.permute.xlu0 %1511
        %1513 = vrot.lane.b32.xlu0 %v1508, 61
        %v1514 = vpop.permute.xlu0 %1513
        %vm1515 = vcmask 498688
        %v1516 = vsel %vm1515, %v1510, %v1512
        %v1517 = vsel %vm1515, %v1512, %v1514
        %1520 = vst [vmem:[#allocation5 + $0xb0] sm:$0xf0] %v1516
        %1521 = vst [vmem:[#allocation5 + $0xb8] sm:$0xf0] %v1517
        %v1522 = vld [vmem:[#allocation4] sm:$0xff]
        %v1523 = vld [vmem:[#allocation4 + $0x8] sm:$0xf]
        %1524 = vrot.lane.b32.xlu0 %v921, 68
        %v1525 = vpop.permute.xlu0 %1524
        %v1526 = vrot.slane %v1525, 4
        %vm1527 = vcmask 556032
        %v1528 = vsel %vm1527, %v1526, %v1525
        %v1531 = vmul.f32 %v1522, %v1528
        %v1532 = vmul.f32 %v1523, %v1526
        %1535 = vst [vmem:[#allocation1] ss:$2 sm:$0xff] %v1531
        %s1536 = scalar_lea.vmem [#allocation1], 16
        %1537 = vst [vmem:[%s1536] ss:$2 sm:$0xff] %v1532
        %v1538 = vld.sshfl [vmem:[#allocation1] sm:$0xff pattern:$0x75316420]
        %v1539 = vld.sshfl [vmem:[#allocation1 + $0x8] sm:$0xff pattern:$0x75316420]
        %v1540 = vld.sshfl [vmem:[#allocation1 + $0x10] sm:$0xff pattern:$0x75316420]
        %1541 = vrot.lane.b32.xlu0 %v1538, 60
        %v1542 = vpop.permute.xlu0 %1541
        %1543 = vrot.lane.b32.xlu0 %v1539, 60
        %v1544 = vpop.permute.xlu0 %1543
        %1545 = vrot.lane.b32.xlu0 %v1540, 60
        %v1546 = vpop.permute.xlu0 %1545
        %vm1547 = vcmask 490496
        %v1548 = vsel %vm1547, %v1542, %v1544
        %v1549 = vsel %vm1547, %v1544, %v1546
        %1552 = vst [vmem:[#allocation5 + $0xc0] sm:$0xf] %v1548
        %1553 = vst [vmem:[#allocation5 + $0xc8] sm:$0xf] %v1549
        %v1554 = vld [vmem:[%s5] sm:$0xff]
        %v1555 = vld [vmem:[#allocation5] sm:$0xff]
        %v1556 = vld [vmem:[#allocation5 + $0x8] sm:$0xff]
        %v1557 = vld [vmem:[#allocation5 + $0x10] sm:$0xff]
        %v1558 = vld [vmem:[#allocation5 + $0x18] sm:$0xff]
        %v1559 = vld [vmem:[#allocation5 + $0x20] sm:$0xff]
        %v1560 = vld [vmem:[#allocation5 + $0x28] sm:$0xff]
        %v1561 = vld [vmem:[#allocation5 + $0x30] sm:$0xff]
        %v1562 = vld [vmem:[#allocation5 + $0x38] sm:$0xff]
        %v1563 = vld [vmem:[#allocation5 + $0x40] sm:$0xff]
        %v1564 = vld [vmem:[#allocation5 + $0x48] sm:$0xff]
        %v1565 = vld [vmem:[#allocation5 + $0x50] sm:$0xff]
        %v1566 = vld [vmem:[#allocation5 + $0x58] sm:$0xff]
        %v1567 = vld [vmem:[#allocation5 + $0x60] sm:$0xff]
        %v1568 = vld [vmem:[#allocation5 + $0x68] sm:$0xff]
        %v1569 = vld [vmem:[#allocation5 + $0x70] sm:$0xff]
        %v1570 = vld [vmem:[#allocation5 + $0x78] sm:$0xff]
        %v1571 = vld [vmem:[#allocation5 + $0x80] sm:$0xff]
        %v1572 = vld [vmem:[#allocation5 + $0x88] sm:$0xff]
        %v1573 = vld [vmem:[#allocation5 + $0x90] sm:$0xff]
        %v1574 = vld [vmem:[#allocation5 + $0x98] sm:$0xff]
        %v1575 = vld [vmem:[#allocation5 + $0xa0] sm:$0xff]
        %v1576 = vld [vmem:[#allocation5 + $0xa8] sm:$0xff]
        %v1577 = vld [vmem:[#allocation5 + $0xb0] sm:$0xff]
        %v1578 = vld [vmem:[#allocation5 + $0xb8] sm:$0xff]
        %v1579 = vld [vmem:[#allocation5 + $0xc0] sm:$0xf]
        %v1580 = vld [vmem:[#allocation5 + $0xc8] sm:$0xf]
        %v1581 = vld [vmem:[%s6] sm:$0xff]
        %1583 = vset.pattern.permute.xlu0 0
        %1584 = vperm.xlu0 %1583, %v1581
        %v1585 = vpop.permute.xlu0 %1584
        %vm1587 = vcmask 818176
        %v1589 = vsel %vm1587, %v1554, 0
        %v1592 = vsel %vm340, %v1579, 0
        %v1595 = vsel %vm340, %v1580, 0
        %1597 = vmatpush.msra.mxu0 0.0
        %1598 = vmatpush.msra.mxu0 0.0
        %1599 = vmatpush.msra.mxu0 0.0
        %1600 = vmatpush.msra.mxu0 %v1592
        %1601 = vmatpush.msra.mxu0 %v1577
        %1602 = vmatpush.msra.mxu0 %v1575
        %1603 = vmatpush.msra.mxu0 %v1573
        %1604 = vmatpush.msra.mxu0 %v1571
        %1605 = vmatpush.msra.mxu0 %v1569
        %1606 = vmatpush.msra.mxu0 %v1567
        %1607 = vmatpush.msra.mxu0 %v1565
        %1608 = vmatpush.msra.mxu0 %v1563
        %1609 = vmatpush.msra.mxu0 %v1561
        %1610 = vmatpush.msra.mxu0 %v1559
        %1611 = vmatpush.msra.mxu0 %v1557
        %1612 = vmatpush.msra.mxu0 %v1555
        %1613 = vmatmul.f32.gmra.mxu0 %v1589
        %v1614 = vpop.f32.mrf.mxu0
        %v1615 = vadd.f32 %v1585, %v1614
        %1616 = vdwg.mxu0
        %1617 = vmatpush.msra.mxu0 0.0
        %1618 = vmatpush.msra.mxu0 0.0
        %1619 = vmatpush.msra.mxu0 0.0
        %1620 = vmatpush.msra.mxu0 %v1595
        %1621 = vmatpush.msra.mxu0 %v1578
        %1622 = vmatpush.msra.mxu0 %v1576
        %1623 = vmatpush.msra.mxu0 %v1574
        %1624 = vmatpush.msra.mxu0 %v1572
        %1625 = vmatpush.msra.mxu0 %v1570
        %1626 = vmatpush.msra.mxu0 %v1568
        %1627 = vmatpush.msra.mxu0 %v1566
        %1628 = vmatpush.msra.mxu0 %v1564
        %1629 = vmatpush.msra.mxu0 %v1562
        %1630 = vmatpush.msra.mxu0 %v1560
        %1631 = vmatpush.msra.mxu0 %v1558
        %1632 = vmatpush.msra.mxu0 %v1556
        %1633 = vmatmul.f32.gmra.mxu0 %v1589
        %v1634 = vpop.f32.mrf.mxu0
        %v1635 = vadd.f32 %v1585, %v1634
        %1636 = vdwg.mxu0
        %v1637 = vmax.f32 %v1615, 0.0
        %v1638 = vmax.f32 %v1635, 0.0
        %1639 = vst [vmem:[%s271 + $0x20] sm:$0xff] %v1637
        %1640 = vst [vmem:[%s271 + $0x28] sm:$0xff] %v1638
        %1641 = vst.msk [vmem:[#allocation6] sm:$0xff] %vm416, 0.0
        %vm1642 = vcmask 277640
        %1643 = vst.msk [vmem:[#allocation6 + $0x10] sm:$0xff] %vm1642, 0.0
        %1646 = vrot.lane.b32.xlu0 %v401, 17
        %v1647 = vpop.permute.xlu0 %1646
        %1648 = vrot.lane.b32.xlu0 %v402, 17
        %v1649 = vpop.permute.xlu0 %1648
        %v1650 = vsel %vm416, %v1647, %v1649
        %vm1654 = vcmask 1047688
        %1655 = vst.msk [vmem:[#allocation6] sm:$0xff] %vm1654, %v1647
        %1656 = vst [vmem:[#allocation6 + $0x8] sm:$0xff] %v1650
        %1657 = vst.msk [vmem:[#allocation6 + $0x10] sm:$0xff] %vm416, %v1649
        %v1658 = vld [vmem:[#allocation6] sm:$0xff]
        %v1659 = vld [vmem:[#allocation6 + $0x8] sm:$0xff]
        %v1660 = vmul.f32 %v1658, %v436
        %v1661 = vmul.f32 %v1659, %v437
        %v1662 = vld [vmem:[#allocation6 + $0x10] sm:$0xff]
        %1666 = vrot.lane.b32.xlu0 %v1658, 127
        %v1667 = vpop.permute.xlu0 %1666
        %1668 = vrot.lane.b32.xlu0 %v1659, 127
        %v1669 = vpop.permute.xlu0 %1668
        %1670 = vrot.lane.b32.xlu0 %v1662, 127
        %v1671 = vpop.permute.xlu0 %1670
        %v1672 = vsel %vm469, %v1667, %v1669
        %v1673 = vsel %vm469, %v1669, %v1671
        %v1676 = vmax.f32 %v1660, %v1672
        %v1677 = vmax.f32 %v1661, %v1673
        %1678 = vrot.lane.b32.xlu0 %v488, 2
        %v1679 = vpop.permute.xlu0 %1678
        %1680 = vrot.lane.b32.xlu0 %v489, 2
        %v1681 = vpop.permute.xlu0 %1680
        %v1682 = vsel %vm497, %v1679, %v1681
        %v1686 = vmul.f32 %v1658, %v1679
        %v1687 = vmul.f32 %v1659, %v1682
        %v1688 = vmul.f32 %v1662, %v1681
        %1692 = vrot.lane.b32.xlu0 %v1686, 126
        %v1693 = vpop.permute.xlu0 %1692
        %1694 = vrot.lane.b32.xlu0 %v1687, 126
        %v1695 = vpop.permute.xlu0 %1694
        %1696 = vrot.lane.b32.xlu0 %v1688, 126
        %v1697 = vpop.permute.xlu0 %1696
        %v1698 = vsel %vm517, %v1693, %v1695
        %v1699 = vsel %vm517, %v1695, %v1697
        %v1702 = vmax.f32 %v1676, %v1698
        %v1703 = vmax.f32 %v1677, %v1699
        %1704 = vrot.lane.b32.xlu0 %v436, 16
        %v1705 = vpop.permute.xlu0 %1704
        %1706 = vrot.lane.b32.xlu0 %v437, 16
        %v1707 = vpop.permute.xlu0 %1706
        %v1708 = vsel %vm529, %v1705, %v1707
        %v1712 = vmul.f32 %v1658, %v1705
        %v1713 = vmul.f32 %v1659, %v1708
        %v1714 = vmul.f32 %v1662, %v1707
        %1718 = vrot.lane.b32.xlu0 %v1712, 112
        %v1719 = vpop.permute.xlu0 %1718
        %1720 = vrot.lane.b32.xlu0 %v1713, 112
        %v1721 = vpop.permute.xlu0 %1720
        %1722 = vrot.lane.b32.xlu0 %v1714, 112
        %v1723 = vpop.permute.xlu0 %1722
        %v1724 = vsel %vm550, %v1719, %v1721
        %v1725 = vsel %vm550, %v1721, %v1723
        %v1728 = vmax.f32 %v1702, %v1724
        %v1729 = vmax.f32 %v1703, %v1725
        %1730 = vrot.lane.b32.xlu0 %v1658, 111
        %v1731 = vpop.permute.xlu0 %1730
        %1732 = vrot.lane.b32.xlu0 %v1659, 111
        %v1733 = vpop.permute.xlu0 %1732
        %1734 = vrot.lane.b32.xlu0 %v1662, 111
        %v1735 = vpop.permute.xlu0 %1734
        %v1736 = vsel %vm573, %v1731, %v1733
        %v1737 = vsel %vm573, %v1733, %v1735
        %v1740 = vmax.f32 %v1728, %v1736
        %v1741 = vmax.f32 %v1729, %v1737
        %1742 = vrot.lane.b32.xlu0 %v488, 18
        %v1743 = vpop.permute.xlu0 %1742
        %1744 = vrot.lane.b32.xlu0 %v489, 18
        %v1745 = vpop.permute.xlu0 %1744
        %v1746 = vsel %vm585, %v1743, %v1745
        %v1750 = vmul.f32 %v1658, %v1743
        %v1751 = vmul.f32 %v1659, %v1746
        %v1752 = vmul.f32 %v1662, %v1745
        %1756 = vrot.lane.b32.xlu0 %v1750, 110
        %v1757 = vpop.permute.xlu0 %1756
        %1758 = vrot.lane.b32.xlu0 %v1751, 110
        %v1759 = vpop.permute.xlu0 %1758
        %1760 = vrot.lane.b32.xlu0 %v1752, 110
        %v1761 = vpop.permute.xlu0 %1760
        %v1762 = vsel %vm606, %v1757, %v1759
        %v1763 = vsel %vm606, %v1759, %v1761
        %v1766 = vmax.f32 %v1740, %v1762
        %v1767 = vmax.f32 %v1741, %v1763
        %1768 = vrot.lane.b32.xlu0 %v436, 32
        %v1769 = vpop.permute.xlu0 %1768
        %1770 = vrot.lane.b32.xlu0 %v437, 32
        %v1771 = vpop.permute.xlu0 %1770
        %v1772 = vsel %vm618, %v1769, %v1771
        %v1776 = vmul.f32 %v1658, %v1769
        %v1777 = vmul.f32 %v1659, %v1772
        %v1778 = vmul.f32 %v1662, %v1771
        %1782 = vrot.lane.b32.xlu0 %v1776, 96
        %v1783 = vpop.permute.xlu0 %1782
        %1784 = vrot.lane.b32.xlu0 %v1777, 96
        %v1785 = vpop.permute.xlu0 %1784
        %1786 = vrot.lane.b32.xlu0 %v1778, 96
        %v1787 = vpop.permute.xlu0 %1786
        %v1788 = vsel %vm638, %v1783, %v1785
        %v1789 = vsel %vm638, %v1785, %v1787
        %v1792 = vmax.f32 %v1766, %v1788
        %v1793 = vmax.f32 %v1767, %v1789
        %1794 = vrot.lane.b32.xlu0 %v1658, 95
        %v1795 = vpop.permute.xlu0 %1794
        %1796 = vrot.lane.b32.xlu0 %v1659, 95
        %v1797 = vpop.permute.xlu0 %1796
        %1798 = vrot.lane.b32.xlu0 %v1662, 95
        %v1799 = vpop.permute.xlu0 %1798
        %v1800 = vsel %vm662, %v1795, %v1797
        %v1801 = vsel %vm662, %v1797, %v1799
        %v1804 = vmax.f32 %v1792, %v1800
        %v1805 = vmax.f32 %v1793, %v1801
        %1806 = vrot.lane.b32.xlu0 %v488, 34
        %v1807 = vpop.permute.xlu0 %1806
        %1808 = vrot.lane.b32.xlu0 %v489, 34
        %v1809 = vpop.permute.xlu0 %1808
        %v1810 = vsel %vm674, %v1807, %v1809
        %v1814 = vmul.f32 %v1658, %v1807
        %v1815 = vmul.f32 %v1659, %v1810
        %v1816 = vmul.f32 %v1662, %v1809
        %1820 = vrot.lane.b32.xlu0 %v1814, 94
        %v1821 = vpop.permute.xlu0 %1820
        %1822 = vrot.lane.b32.xlu0 %v1815, 94
        %v1823 = vpop.permute.xlu0 %1822
        %1824 = vrot.lane.b32.xlu0 %v1816, 94
        %v1825 = vpop.permute.xlu0 %1824
        %v1826 = vsel %vm694, %v1821, %v1823
        %v1827 = vsel %vm694, %v1823, %v1825
        %v1830 = vmax.f32 %v1804, %v1826
        %v1831 = vmax.f32 %v1805, %v1827
        %1832 = vst [vmem:[%s271 + $0x30] sm:$0xff] %v1830
        %1833 = vst [vmem:[%s271 + $0x38] sm:$0xff] %v1831
        %s1834 = sand.u32 %s181, 1
        %s1835 = scalar_lea.sflag [#allocation8], %s1834
        %s1836 = sand.u32 %s181, 1
        %s1837 = smul.addr %s1836, 64
        %s1838 = scalar_lea.vmem [#allocation7], %s1837
        // Predicated region
        $region49: #{tpu_custom_call.1} parent=47 // pred_check
          %p1839 = pneg %p191
        $region50: #{tpu_custom_call.1} parent=47 // pred_check_branch
          %1841 = sbr.rel (%p1839) target = $region52
        $region51: #{tpu_custom_call.1} parent=47 // pred_region
          %1843 = vsyncadd %s1835, 0
          %s1844 = smul.addr %s21, 8
          %s1845 = smul.addr %s1844, 8
          %s1846 = scalar_lea.hbm %s7, %s1845
          %s1847 = sshll.u32 %s1838, 4
          %s1848 = int_to_ptr.vmem [resolvable:$true] %s1847
          %s1849 = sshll.u32 %s1846, 4
          %s1850 = int_to_ptr.hbm [resolvable:$true] %s1849
          %1855 = dma.vmem_to_hbm [thread:$0]  %s1848, 1024, %s1850, %s1835, 256, 256, 16
        $region52: #{tpu_custom_call.1} parent=47 // pred_fallthru
          _
      $region48: #{tpu_custom_call.1} parent=5 // pred_fallthru
        _
      %p1856 = scmp.le.s32.totalorder 2, %s16
      // Predicated region
      $region53: #{tpu_custom_call.1} parent=5 // pred_check
        %p1857 = pneg %p1856
      $region54: #{tpu_custom_call.1} parent=5 // pred_check_branch
        %1859 = sbr.rel (%p1857) target = $region56
      $region55: #{tpu_custom_call.1} parent=5 // pred_region
        %s1860 = ssub.s32 %s16, 2
        // Predicated region
        $region57: #{tpu_custom_call.1} parent=55 // pred_check
          %p1861 = pneg %p197
        $region58: #{tpu_custom_call.1} parent=55 // pred_check_branch
          %1863 = sbr.rel (%p1861) target = $region60
        $region59: #{tpu_custom_call.1} parent=55 // pred_region
          %s1864 = sand.u32 %s182, 1
          %s1865 = scalar_lea.sflag [#allocation8], %s1864
          %s1866 = sand.u32 %s182, 1
          %s1867 = smul.addr %s1866, 64
          %s1868 = scalar_lea.vmem [#allocation7], %s1867
          %1870 = dma.done %s1865, 1024
        $region60: #{tpu_custom_call.1} parent=55 // pred_fallthru
          _
      $region56: #{tpu_custom_call.1} parent=5 // pred_fallthru
        _
    $region6: #{tpu_custom_call.1} parent=1 // loop_footer
      %s20 = sadd.s32 1, %s16
    $region7: #{tpu_custom_call.1} parent=1 // loop_footer_branch
      %15 = sbr.rel target = $region3
    $region8: #{tpu_custom_call.1} parent=1 // loop_exit
      _
    %1871 = vsyncpa [#allocation8], 1
    %s1872 = scalar_lea.sflag [#allocation8], 1
    %1873 = vsyncpa %s1872, 1

</llo_original>
